<compile_context>
chip_gen: v7x
topology: tpu7x:2x2x1
jax: 0.10.0
libtpu: 0.0.40
codegen_flags: <defaults>
</compile_context>

<pallas_src>
import jax
import jax.numpy as jnp
from jax.experimental import pallas as pl
from jax.experimental.pallas import tpu as pltpu

FEAT = 64          # fused feature dim (fc1 expects 64)
HIDDEN = 30        # fc1 output / LayerNorm dim
NB_CLASSES = 2
TILE_B = 1024      # batch rows per grid step (>=512 per HBM-roofline tile sweep)
TILE_K = 512       # img_in reduction tile (512-1024 keeps per-step DMA >= 1-2 MB)


def _round_up(x, m):
    return ((x + m - 1) // m) * m


def _pick_tk(img_in, tile_k):
    """Largest multiple-of-128 divisor of img_in that is <= tile_k (else img_in)."""
    if img_in <= tile_k:
        return img_in
    for cand in range(tile_k, 127, -128):
        if img_in % cand == 0:
            return cand
    # TODO(synk): img_in not a multiple of 128 -> single K block (ragged K reads
    # would corrupt the reduction); pad the backbone feature dim upstream instead.
    return img_in


def _vmem_limit_bytes(tb, tk, ehr_in):
    """Scoped-VMEM request sized to the actual (padded, double-buffered) blocks."""
    lane = 128

    def pad(r, c, elem):
        return _round_up(r, 8) * _round_up(c, lane) * elem

    need = 0
    need += 2 * pad(tb, tk, 4)                  # x1 tile (f32, double-buffered)
    need += 2 * pad(tk, FEAT, 2)                # w_img tile (bf16, streamed over k)
    need += 2 * pad(tb, ehr_in, 4)              # x2 tile (f32)
    need += 2 * pad(ehr_in, FEAT, 2)            # w_ehr (resident)
    need += 2 * (2 * pad(1, FEAT, 4) + pad(FEAT, HIDDEN, 4) + 3 * pad(1, HIDDEN, 4)
                 + pad(HIDDEN, NB_CLASSES, 4) + pad(1, NB_CLASSES, 4))
    need += 2 * pad(tb, NB_CLASSES, 4)          # output tile
    need += pad(tb, FEAT, 4)                    # f32 K accumulator scratch
    return min(int(need * 1.5) + (4 << 20), 48 << 20)


def foaa_kernel(att_ref,                        # SMEM (16,): [wq,bq,wk,bk,wv,bv,wo,bo] x2
                x1_ref, wimg_ref, bimg_ref,     # image branch
                x2_ref, wehr_ref, behr_ref,     # EHR branch
                fc1w_ref, fc1b_ref,
                lng_ref, lnb_ref,
                outw_ref, outb_ref,
                o_ref,
                acc_ref):                       # (tb, 64) f32 K accumulator
    k_step = pl.program_id(1)

    @pl.when(k_step == 0)
    def _():
        acc_ref[...] = jnp.zeros_like(acc_ref)

    # Image backbone partial matmul: x1 streamed as f32 from HBM, cast to bf16
    # on-chip (no extra HBM cast pass), MXU accumulates in f32.
    acc_ref[...] += jnp.dot(x1_ref[...].astype(jnp.bfloat16), wimg_ref[...],
                            preferred_element_type=jnp.float32)

    @pl.when(k_step == pl.num_programs(1) - 1)
    def _():
        f1 = acc_ref[...] + bimg_ref[...]                       # (tb, 64)
        f2 = jnp.dot(x2_ref[...].astype(jnp.bfloat16), wehr_ref[...],
                     preferred_element_type=jnp.float32) + behr_ref[...]

        # cross_att, d_model = num_heads = 1, attention_op == "add".
        # scores[i, j] = q[i] + k[j]  =>  softmax over j cancels q, so every
        # position gets the same per-batch context scalar (wq, bq cancel).
        # Valid only for purely additive scores + softmax over the key axis.
        def cross_att(xkv, base):
            wk = att_ref[base + 2]; bk = att_ref[base + 3]
            wv = att_ref[base + 4]; bv = att_ref[base + 5]
            wo = att_ref[base + 6]; bo = att_ref[base + 7]
            kk = xkv * wk + bk                                  # (tb, 64)
            vv = xkv * wv + bv
            mm = jnp.max(kk, axis=-1, keepdims=True)
            ee = jnp.exp(kk - mm)
            # Exact normalization (no approx reciprocal): free under HBM roofline.
            ctx = jnp.sum(ee * vv, axis=-1, keepdims=True) / jnp.sum(
                ee, axis=-1, keepdims=True)
            return ctx * wo + bo                                # (tb, 1) broadcast

        i_prim = cross_att(f2, 0)     # att1(x1, x2): kv = EHR features
        e_prim = cross_att(f1, 8)     # att2(x2, x1): kv = image features

        # torch.sum(torch.stack([I_prim, EHR_prim, x1, x2]), dim=0), then flatten
        x = i_prim + e_prim + f1 + f2                           # (tb, 64)

        # fc1 -> LayerNorm(30) -> (dropout identity in eval) -> ReLU -> layer_out
        h = jnp.dot(x, fc1w_ref[...],
                    preferred_element_type=jnp.float32) + fc1b_ref[...]
        mu = jnp.mean(h, axis=-1, keepdims=True)
        var = jnp.mean((h - mu) * (h - mu), axis=-1, keepdims=True)
        h = (h - mu) * jax.lax.rsqrt(var + 1e-5) * lng_ref[...] + lnb_ref[...]
        # TODO(synk): nn.Dropout(p=0.01) is identity in eval mode; no kernel op emitted.
        h = jnp.maximum(h, 0.0)
        o = jnp.dot(h, outw_ref[...],
                    preferred_element_type=jnp.float32) + outb_ref[...]
        o_ref[...] = o.astype(o_ref.dtype)


def foaa_forward(x1_img, x2_ehr, params, *, tile_b=TILE_B, tile_k=TILE_K):
    B = x1_img.shape[0]
    # NCHW row-major flatten (matches torch .flatten); no cast, no pad: the f32
    # x1 stream is read once by the kernel and cast to bf16 on-chip.
    x1_flat = x1_img.reshape(B, -1)
    x2_flat = x2_ehr.reshape(B, -1)
    img_in = x1_flat.shape[1]
    ehr_in = x2_flat.shape[1]

    # One-time weight casts (tiny vs. the per-call x1 stream).
    w_img = params["w_img"].astype(jnp.bfloat16)
    w_ehr = params["w_ehr"].astype(jnp.bfloat16)
    att = params["att"].reshape(16)      # 1D SMEM (2D SMEM would pad to 8x128 words)

    # K-reduction tiling of img_in keeps the per-step working set at a few MB
    # regardless of backbone width (fits v7x 64 MiB VMEM and v5e scoped limits).
    tk = _pick_tk(img_in, tile_k)
    n_k = pl.cdiv(img_in, tk)            # == img_in // tk by construction

    # Batch tiling: large tiles for HBM efficiency, but >= 2 (even) grid steps
    # once B >= 16 so both v7x TensorCores get work.  Ragged last tiles use
    # Pallas OOB masking (reads unspecified, writes dropped) — no padded copy.
    if B < 16:
        tb = B
    else:
        tb = min(tile_b, _round_up(pl.cdiv(B, 2), 8))
        if pl.cdiv(B, tb) % 2:
            tb = _round_up(pl.cdiv(B, pl.cdiv(B, tb) + 1), 8)
    n_blk = pl.cdiv(B, tb)

    def fixed(shape):
        # Constant-index blocks stay VMEM-resident across the grid; after
        # K-tiling every one of them is <= ~16 KB, so single-buffering them
        # (pl.Buffered(1)) would save <100 KB and is intentionally omitted.
        return pl.BlockSpec(shape, lambda i, k: (0, 0))

    return pl.pallas_call(
        foaa_kernel,
        out_shape=jax.ShapeDtypeStruct((B, NB_CLASSES), jnp.float32),
        grid=(n_blk, n_k),
        in_specs=[
            pl.BlockSpec(memory_space=pltpu.MemorySpace.SMEM),    # att scalars (16,)
            pl.BlockSpec((tb, tk), lambda i, k: (i, k)),          # x1 tile (f32)
            pl.BlockSpec((tk, FEAT), lambda i, k: (k, 0)),        # w_img tile (bf16)
            fixed((1, FEAT)),                                     # b_img
            pl.BlockSpec((tb, ehr_in), lambda i, k: (i, 0)),      # x2 tile (f32)
            fixed((ehr_in, FEAT)),                                # w_ehr (bf16)
            fixed((1, FEAT)),                                     # b_ehr
            fixed((FEAT, HIDDEN)),                                # fc1_w
            fixed((1, HIDDEN)),                                   # fc1_b
            fixed((1, HIDDEN)),                                   # ln_g
            fixed((1, HIDDEN)),                                   # ln_b
            fixed((HIDDEN, NB_CLASSES)),                          # out_w
            fixed((1, NB_CLASSES)),                               # out_b
        ],
        out_specs=pl.BlockSpec((tb, NB_CLASSES), lambda i, k: (i, 0)),
        scratch_shapes=[pltpu.VMEM((tb, FEAT), jnp.float32)],     # f32 K accumulator
        compiler_params=pltpu.CompilerParams(
            dimension_semantics=("parallel", "arbitrary"),
            vmem_limit_bytes=_vmem_limit_bytes(tb, tk, ehr_in)),
    )(att,
      x1_flat, w_img, params["b_img"],
      x2_flat, w_ehr, params["b_ehr"],
      params["fc1_w"], params["fc1_b"],
      params["ln_g"], params["ln_b"],
      params["out_w"], params["out_b"])


def init_params(key, img_in, ehr_in):
    ks = jax.random.split(key, 5)

    def linear(k, fin, fout):
        lim = 1.0 / (fin ** 0.5)
        kw, kb = jax.random.split(k)
        w = jax.random.uniform(kw, (fin, fout), jnp.float32, -lim, lim)
        b = jax.random.uniform(kb, (1, fout), jnp.float32, -lim, lim)
        return w, b

    w_img, b_img = linear(ks[0], img_in, FEAT)
    w_ehr, b_ehr = linear(ks[1], ehr_in, FEAT)
    fc1_w, fc1_b = linear(ks[2], FEAT, HIDDEN)
    out_w, out_b = linear(ks[3], HIDDEN, NB_CLASSES)
    # [wq, bq, wk, bk, wv, bv, wo, bo] for att1, then the same 8 for att2.
    att = jax.random.uniform(ks[4], (16,), jnp.float32, -1.0, 1.0)
    return dict(
        w_img=w_img, b_img=b_img, w_ehr=w_ehr, b_ehr=b_ehr,
        fc1_w=fc1_w, fc1_b=fc1_b,
        ln_g=jnp.ones((1, HIDDEN), jnp.float32),
        ln_b=jnp.zeros((1, HIDDEN), jnp.float32),
        out_w=out_w, out_b=out_b, att=att,
    )


def foaa_reference(x1_img, x2_ehr, p):
    """Pure-JAX reference mirroring the kernel's intended numerics
    (bf16 backbone matmuls with f32 accumulation; exact full additive softmax)."""
    B = x1_img.shape[0]
    f1 = jnp.dot(x1_img.reshape(B, -1).astype(jnp.bfloat16),
                 p["w_img"].astype(jnp.bfloat16),
                 preferred_element_type=jnp.float32) + p["b_img"]
    f2 = jnp.dot(x2_ehr.reshape(B, -1).astype(jnp.bfloat16),
                 p["w_ehr"].astype(jnp.bfloat16),
                 preferred_element_type=jnp.float32) + p["b_ehr"]

    def ca(xkv, base):
        a = p["att"].reshape(16)
        # Full additive attention: softmax_j(q_i + k_j) reduces to softmax_j(k_j).
        k = xkv * a[base + 2] + a[base + 3]
        v = xkv * a[base + 4] + a[base + 5]
        attn = jax.nn.softmax(k, axis=-1)
        ctx = jnp.sum(attn * v, axis=-1, keepdims=True)
        return ctx * a[base + 6] + a[base + 7]

    x = ca(f2, 0) + ca(f1, 8) + f1 + f2
    h = x @ p["fc1_w"] + p["fc1_b"]
    mu = jnp.mean(h, axis=-1, keepdims=True)
    var = jnp.mean((h - mu) ** 2, axis=-1, keepdims=True)
    h = (h - mu) * jax.lax.rsqrt(var + 1e-5) * p["ln_g"] + p["ln_b"]
    h = jnp.maximum(h, 0.0)
    return h @ p["out_w"] + p["out_b"]


if __name__ == "__main__":
    key = jax.random.PRNGKey(0)
    k_img, k_ehr, k_par = jax.random.split(key, 3)

    B, C, H, W = 2, 4, 16, 16        # image input (NCHW, PyTorch convention)
    EHR = 8                          # EHR input (B, 1, EHR)

    x1 = jax.random.normal(k_img, (B, C, H, W), jnp.float32)
    x2 = jax.random.normal(k_ehr, (B, 1, EHR), jnp.float32)
    params = init_params(k_par, C * H * W, EHR)

    out = jax.block_until_ready(foaa_forward(x1, x2, params))

    ref = foaa_reference(x1, x2, params)
    assert out.shape == (B, NB_CLASSES)
    assert jnp.allclose(out, ref, rtol=2e-3, atol=2e-3), (out, ref)

    print("KERNEL_OK")
</pallas_src>

<mosaic_0001>
module attributes {stable_mosaic.version = 11 : i64} {
  func.func @foaa_kernel(%arg0: i32, %arg1: i32, %arg2: memref<16xf32, #tpu.memory_space<smem>>, %arg3: memref<2x512xf32, #tpu.memory_space<vmem>>, %arg4: memref<512x64xbf16, #tpu.memory_space<vmem>>, %arg5: memref<1x64xf32, #tpu.memory_space<vmem>>, %arg6: memref<2x8xf32, #tpu.memory_space<vmem>>, %arg7: memref<8x64xbf16, #tpu.memory_space<vmem>>, %arg8: memref<1x64xf32, #tpu.memory_space<vmem>>, %arg9: memref<64x30xf32, #tpu.memory_space<vmem>>, %arg10: memref<1x30xf32, #tpu.memory_space<vmem>>, %arg11: memref<1x30xf32, #tpu.memory_space<vmem>>, %arg12: memref<1x30xf32, #tpu.memory_space<vmem>>, %arg13: memref<30x2xf32, #tpu.memory_space<vmem>>, %arg14: memref<1x2xf32, #tpu.memory_space<vmem>>, %arg15: memref<2x2xf32, #tpu.memory_space<vmem>>, %arg16: memref<2x64xf32, #tpu.memory_space<vmem>>) attributes {dimension_semantics = [#tpu.dimension_semantics<parallel>, #tpu.dimension_semantics<arbitrary>], iteration_bounds = array<i64: 1, 2>, scalar_prefetch = 0 : i64, scratch_operands = 1 : i64, tpu.core_type = #tpu.core_type<tc>, window_params = [{transform_indices = @transform_0, window_bounds = array<i64: 16>}, {transform_indices = @transform_1, window_bounds = array<i64: 2, 512>}, {transform_indices = @transform_2, window_bounds = array<i64: 512, 64>}, {pipeline_mode = #tpu.pipeline_mode<synchronous>, transform_indices = @transform_3, window_bounds = array<i64: 1, 64>}, {transform_indices = @transform_4, window_bounds = array<i64: 2, 8>}, {pipeline_mode = #tpu.pipeline_mode<synchronous>, transform_indices = @transform_5, window_bounds = array<i64: 8, 64>}, {pipeline_mode = #tpu.pipeline_mode<synchronous>, transform_indices = @transform_6, window_bounds = array<i64: 1, 64>}, {pipeline_mode = #tpu.pipeline_mode<synchronous>, transform_indices = @transform_7, window_bounds = array<i64: 64, 30>}, {pipeline_mode = #tpu.pipeline_mode<synchronous>, transform_indices = @transform_8, window_bounds = array<i64: 1, 30>}, {pipeline_mode = #tpu.pipeline_mode<synchronous>, transform_indices = @transform_9, window_bounds = array<i64: 1, 30>}, {pipeline_mode = #tpu.pipeline_mode<synchronous>, transform_indices = @transform_10, window_bounds = array<i64: 1, 30>}, {pipeline_mode = #tpu.pipeline_mode<synchronous>, transform_indices = @transform_11, window_bounds = array<i64: 30, 2>}, {pipeline_mode = #tpu.pipeline_mode<synchronous>, transform_indices = @transform_12, window_bounds = array<i64: 1, 2>}, {transform_indices = @transform_13, window_bounds = array<i64: 2, 2>}]} {
    %c0_i32 = arith.constant 0 : i32
    %0 = arith.cmpi eq, %arg1, %c0_i32 : i32
    %1 = arith.extui %0 : i1 to i32
    %c0_i32_0 = arith.constant 0 : i32
    %2 = arith.cmpi ne, %1, %c0_i32_0 : i32
    scf.if %2 {
      %cst_9 = arith.constant 0.000000e+00 : f32
      %13 = vector.broadcast %cst_9 : f32 to vector<2x64xf32>
      %c0_10 = arith.constant 0 : index
      %c0_11 = arith.constant 0 : index
      %14 = vector.load %arg16[%c0_10, %c0_11] : memref<2x64xf32, #tpu.memory_space<vmem>>, vector<2x64xf32>
      tpu.vector_store %arg16[%c0_10, %c0_11], %13 {strides = array<i32>} : memref<2x64xf32, #tpu.memory_space<vmem>>, vector<2x64xf32>,
    } else {
    }
    %c0 = arith.constant 0 : index
    %c0_1 = arith.constant 0 : index
    %3 = vector.load %arg16[%c0, %c0_1] : memref<2x64xf32, #tpu.memory_space<vmem>>, vector<2x64xf32>
    %c0_2 = arith.constant 0 : index
    %c0_3 = arith.constant 0 : index
    %4 = vector.load %arg3[%c0_2, %c0_3] : memref<2x512xf32, #tpu.memory_space<vmem>>, vector<2x512xf32>
    %5 = arith.truncf %4 : vector<2x512xf32> to vector<2x512xbf16>
    %c0_4 = arith.constant 0 : index
    %c0_5 = arith.constant 0 : index
    %6 = vector.load %arg4[%c0_4, %c0_5] : memref<512x64xbf16, #tpu.memory_space<vmem>>, vector<512x64xbf16>
    %cst = arith.constant dense<0.000000e+00> : vector<2x64xf32>
    %7 = tpu.matmul %5, %6, %cst {dimension_numbers = #tpu.dot_dimension_numbers<[1], [0], [0], [1], [0, 0, 1, 1], [], []>} : vector<2x512xbf16>, vector<512x64xbf16>, vector<2x64xf32> -> vector<2x64xf32>
    %8 = arith.addf %3, %7 : vector<2x64xf32>
    %c0_6 = arith.constant 0 : index
    %c0_7 = arith.constant 0 : index
    %9 = vector.load %arg16[%c0_6, %c0_7] : memref<2x64xf32, #tpu.memory_space<vmem>>, vector<2x64xf32>
    tpu.vector_store %arg16[%c0_6, %c0_7], %8 {strides = array<i32>} : memref<2x64xf32, #tpu.memory_space<vmem>>, vector<2x64xf32>,
    %c1_i32 = arith.constant 1 : i32
    %10 = arith.cmpi eq, %arg1, %c1_i32 : i32
    %11 = arith.extui %10 : i1 to i32
    %c0_i32_8 = arith.constant 0 : i32
    %12 = arith.cmpi ne, %11, %c0_i32_8 : i32
    scf.if %12 {
      %c0_9 = arith.constant 0 : index
      %c0_10 = arith.constant 0 : index
      %13 = vector.load %arg16[%c0_9, %c0_10] : memref<2x64xf32, #tpu.memory_space<vmem>>, vector<2x64xf32>
      %c0_11 = arith.constant 0 : index
      %c0_12 = arith.constant 0 : index
      %14 = vector.load %arg5[%c0_11, %c0_12] : memref<1x64xf32, #tpu.memory_space<vmem>>, vector<1x64xf32>
      %15 = vector.broadcast %14 : vector<1x64xf32> to vector<2x64xf32>
      %16 = arith.addf %13, %15 : vector<2x64xf32>
      %c0_13 = arith.constant 0 : index
      %c0_14 = arith.constant 0 : index
      %17 = vector.load %arg6[%c0_13, %c0_14] : memref<2x8xf32, #tpu.memory_space<vmem>>, vector<2x8xf32>
      %18 = arith.truncf %17 : vector<2x8xf32> to vector<2x8xbf16>
      %c0_15 = arith.constant 0 : index
      %c0_16 = arith.constant 0 : index
      %19 = vector.load %arg7[%c0_15, %c0_16] : memref<8x64xbf16, #tpu.memory_space<vmem>>, vector<8x64xbf16>
      %cst_17 = arith.constant dense<0.000000e+00> : vector<2x64xf32>
      %20 = tpu.matmul %18, %19, %cst_17 {dimension_numbers = #tpu.dot_dimension_numbers<[1], [0], [0], [1], [0, 0, 1, 1], [], []>} : vector<2x8xbf16>, vector<8x64xbf16>, vector<2x64xf32> -> vector<2x64xf32>
      %c0_18 = arith.constant 0 : index
      %c0_19 = arith.constant 0 : index
      %21 = vector.load %arg8[%c0_18, %c0_19] : memref<1x64xf32, #tpu.memory_space<vmem>>, vector<1x64xf32>
      %22 = vector.broadcast %21 : vector<1x64xf32> to vector<2x64xf32>
      %23 = arith.addf %20, %22 : vector<2x64xf32>
      %c2 = arith.constant 2 : index
      %24 = memref.load %arg2[%c2] : memref<16xf32, #tpu.memory_space<smem>>
      %c3 = arith.constant 3 : index
      %25 = memref.load %arg2[%c3] : memref<16xf32, #tpu.memory_space<smem>>
      %c4 = arith.constant 4 : index
      %26 = memref.load %arg2[%c4] : memref<16xf32, #tpu.memory_space<smem>>
      %c5 = arith.constant 5 : index
      %27 = memref.load %arg2[%c5] : memref<16xf32, #tpu.memory_space<smem>>
      %c6 = arith.constant 6 : index
      %28 = memref.load %arg2[%c6] : memref<16xf32, #tpu.memory_space<smem>>
      %c7 = arith.constant 7 : index
      %29 = memref.load %arg2[%c7] : memref<16xf32, #tpu.memory_space<smem>>
      %30 = vector.broadcast %24 : f32 to vector<2x64xf32>
      %31 = arith.mulf %23, %30 : vector<2x64xf32>
      %32 = vector.broadcast %25 : f32 to vector<2x64xf32>
      %33 = arith.addf %31, %32 : vector<2x64xf32>
      %34 = vector.broadcast %26 : f32 to vector<2x64xf32>
      %35 = arith.mulf %23, %34 : vector<2x64xf32>
      %36 = vector.broadcast %27 : f32 to vector<2x64xf32>
      %37 = arith.addf %35, %36 : vector<2x64xf32>
      %cst_20 = arith.constant dense<0xFF800000> : vector<2xf32>
      %38 = vector.multi_reduction <maximumf>, %33, %cst_20 [1] : vector<2x64xf32> to vector<2xf32>
      %39 = vector.shape_cast %38 : vector<2xf32> to vector<2x1xf32>
      %40 = vector.broadcast %39 : vector<2x1xf32> to vector<2x64xf32>
      %41 = arith.subf %33, %40 : vector<2x64xf32>
      %42 = math.exp %41 : vector<2x64xf32>
      %43 = arith.mulf %42, %37 : vector<2x64xf32>
      %cst_21 = arith.constant dense<0.000000e+00> : vector<2xf32>
      %44 = vector.multi_reduction <add>, %43, %cst_21 [1] : vector<2x64xf32> to vector<2xf32>
      %45 = vector.shape_cast %44 : vector<2xf32> to vector<2x1xf32>
      %cst_22 = arith.constant dense<0.000000e+00> : vector<2xf32>
      %46 = vector.multi_reduction <add>, %42, %cst_22 [1] : vector<2x64xf32> to vector<2xf32>
      %47 = vector.shape_cast %46 : vector<2xf32> to vector<2x1xf32>
      %48 = arith.divf %45, %47 : vector<2x1xf32>
      %49 = vector.broadcast %28 : f32 to vector<2x1xf32>
      %50 = arith.mulf %48, %49 : vector<2x1xf32>
      %51 = vector.broadcast %29 : f32 to vector<2x1xf32>
      %52 = arith.addf %50, %51 : vector<2x1xf32>
      %c10 = arith.constant 10 : index
      %53 = memref.load %arg2[%c10] : memref<16xf32, #tpu.memory_space<smem>>
      %c11 = arith.constant 11 : index
      %54 = memref.load %arg2[%c11] : memref<16xf32, #tpu.memory_space<smem>>
      %c12 = arith.constant 12 : index
      %55 = memref.load %arg2[%c12] : memref<16xf32, #tpu.memory_space<smem>>
      %c13 = arith.constant 13 : index
      %56 = memref.load %arg2[%c13] : memref<16xf32, #tpu.memory_space<smem>>
      %c14 = arith.constant 14 : index
      %57 = memref.load %arg2[%c14] : memref<16xf32, #tpu.memory_space<smem>>
      %c15 = arith.constant 15 : index
      %58 = memref.load %arg2[%c15] : memref<16xf32, #tpu.memory_space<smem>>
      %59 = vector.broadcast %53 : f32 to vector<2x64xf32>
      %60 = arith.mulf %16, %59 : vector<2x64xf32>
      %61 = vector.broadcast %54 : f32 to vector<2x64xf32>
      %62 = arith.addf %60, %61 : vector<2x64xf32>
      %63 = vector.broadcast %55 : f32 to vector<2x64xf32>
      %64 = arith.mulf %16, %63 : vector<2x64xf32>
      %65 = vector.broadcast %56 : f32 to vector<2x64xf32>
      %66 = arith.addf %64, %65 : vector<2x64xf32>
      %cst_23 = arith.constant dense<0xFF800000> : vector<2xf32>
      %67 = vector.multi_reduction <maximumf>, %62, %cst_23 [1] : vector<2x64xf32> to vector<2xf32>
      %68 = vector.shape_cast %67 : vector<2xf32> to vector<2x1xf32>
      %69 = vector.broadcast %68 : vector<2x1xf32> to vector<2x64xf32>
      %70 = arith.subf %62, %69 : vector<2x64xf32>
      %71 = math.exp %70 : vector<2x64xf32>
      %72 = arith.mulf %71, %66 : vector<2x64xf32>
      %cst_24 = arith.constant dense<0.000000e+00> : vector<2xf32>
      %73 = vector.multi_reduction <add>, %72, %cst_24 [1] : vector<2x64xf32> to vector<2xf32>
      %74 = vector.shape_cast %73 : vector<2xf32> to vector<2x1xf32>
      %cst_25 = arith.constant dense<0.000000e+00> : vector<2xf32>
      %75 = vector.multi_reduction <add>, %71, %cst_25 [1] : vector<2x64xf32> to vector<2xf32>
      %76 = vector.shape_cast %75 : vector<2xf32> to vector<2x1xf32>
      %77 = arith.divf %74, %76 : vector<2x1xf32>
      %78 = vector.broadcast %57 : f32 to vector<2x1xf32>
      %79 = arith.mulf %77, %78 : vector<2x1xf32>
      %80 = vector.broadcast %58 : f32 to vector<2x1xf32>
      %81 = arith.addf %79, %80 : vector<2x1xf32>
      %82 = arith.addf %52, %81 : vector<2x1xf32>
      %83 = vector.broadcast %82 : vector<2x1xf32> to vector<2x64xf32>
      %84 = arith.addf %83, %16 : vector<2x64xf32>
      %85 = arith.addf %84, %23 : vector<2x64xf32>
      %c0_26 = arith.constant 0 : index
      %c0_27 = arith.constant 0 : index
      %86 = vector.load %arg9[%c0_26, %c0_27] : memref<64x30xf32, #tpu.memory_space<vmem>>, vector<64x30xf32>
      %cst_28 = arith.constant dense<0.000000e+00> : vector<2x30xf32>
      %87 = tpu.matmul %85, %86, %cst_28 {dimension_numbers = #tpu.dot_dimension_numbers<[1], [0], [0], [1], [0, 0, 1, 1], [], []>} : vector<2x64xf32>, vector<64x30xf32>, vector<2x30xf32> -> vector<2x30xf32>
      %c0_29 = arith.constant 0 : index
      %c0_30 = arith.constant 0 : index
      %88 = vector.load %arg10[%c0_29, %c0_30] : memref<1x30xf32, #tpu.memory_space<vmem>>, vector<1x30xf32>
      %89 = vector.broadcast %88 : vector<1x30xf32> to vector<2x30xf32>
      %90 = arith.addf %87, %89 : vector<2x30xf32>
      %cst_31 = arith.constant dense<0.000000e+00> : vector<2xf32>
      %91 = vector.multi_reduction <add>, %90, %cst_31 [1] : vector<2x30xf32> to vector<2xf32>
      %92 = vector.shape_cast %91 : vector<2xf32> to vector<2x1xf32>
      %cst_32 = arith.constant 3.000000e+01 : f32
      %93 = vector.broadcast %cst_32 : f32 to vector<2x1xf32>
      %94 = arith.divf %92, %93 : vector<2x1xf32>
      %95 = vector.broadcast %94 : vector<2x1xf32> to vector<2x30xf32>
      %96 = arith.subf %90, %95 : vector<2x30xf32>
      %97 = vector.broadcast %94 : vector<2x1xf32> to vector<2x30xf32>
      %98 = arith.subf %90, %97 : vector<2x30xf32>
      %99 = arith.mulf %96, %98 : vector<2x30xf32>
      %cst_33 = arith.constant dense<0.000000e+00> : vector<2xf32>
      %100 = vector.multi_reduction <add>, %99, %cst_33 [1] : vector<2x30xf32> to vector<2xf32>
      %101 = vector.shape_cast %100 : vector<2xf32> to vector<2x1xf32>
      %cst_34 = arith.constant 3.000000e+01 : f32
      %102 = vector.broadcast %cst_34 : f32 to vector<2x1xf32>
      %103 = arith.divf %101, %102 : vector<2x1xf32>
      %104 = vector.broadcast %94 : vector<2x1xf32> to vector<2x30xf32>
      %105 = arith.subf %90, %104 : vector<2x30xf32>
      %cst_35 = arith.constant 9.99999974E-6 : f32
      %106 = vector.broadcast %cst_35 : f32 to vector<2x1xf32>
      %107 = arith.addf %103, %106 : vector<2x1xf32>
      %108 = math.rsqrt %107 : vector<2x1xf32>
      %109 = vector.broadcast %108 : vector<2x1xf32> to vector<2x30xf32>
      %110 = arith.mulf %105, %109 : vector<2x30xf32>
      %c0_36 = arith.constant 0 : index
      %c0_37 = arith.constant 0 : index
      %111 = vector.load %arg11[%c0_36, %c0_37] : memref<1x30xf32, #tpu.memory_space<vmem>>, vector<1x30xf32>
      %112 = vector.broadcast %111 : vector<1x30xf32> to vector<2x30xf32>
      %113 = arith.mulf %110, %112 : vector<2x30xf32>
      %c0_38 = arith.constant 0 : index
      %c0_39 = arith.constant 0 : index
      %114 = vector.load %arg12[%c0_38, %c0_39] : memref<1x30xf32, #tpu.memory_space<vmem>>, vector<1x30xf32>
      %115 = vector.broadcast %114 : vector<1x30xf32> to vector<2x30xf32>
      %116 = arith.addf %113, %115 : vector<2x30xf32>
      %cst_40 = arith.constant 0.000000e+00 : f32
      %117 = vector.broadcast %cst_40 : f32 to vector<2x30xf32>
      %118 = arith.maximumf %116, %117 : vector<2x30xf32>
      %c0_41 = arith.constant 0 : index
      %c0_42 = arith.constant 0 : index
      %119 = vector.load %arg13[%c0_41, %c0_42] : memref<30x2xf32, #tpu.memory_space<vmem>>, vector<30x2xf32>
      %cst_43 = arith.constant dense<0.000000e+00> : vector<2x2xf32>
      %120 = tpu.matmul %118, %119, %cst_43 {dimension_numbers = #tpu.dot_dimension_numbers<[1], [0], [0], [1], [0, 0, 1, 1], [], []>} : vector<2x30xf32>, vector<30x2xf32>, vector<2x2xf32> -> vector<2x2xf32>
      %c0_44 = arith.constant 0 : index
      %c0_45 = arith.constant 0 : index
      %121 = vector.load %arg14[%c0_44, %c0_45] : memref<1x2xf32, #tpu.memory_space<vmem>>, vector<1x2xf32>
      %122 = vector.broadcast %121 : vector<1x2xf32> to vector<2x2xf32>
      %123 = arith.addf %120, %122 : vector<2x2xf32>
      %c0_46 = arith.constant 0 : index
      %c0_47 = arith.constant 0 : index
      %124 = vector.load %arg15[%c0_46, %c0_47] : memref<2x2xf32, #tpu.memory_space<vmem>>, vector<2x2xf32>
      tpu.vector_store %arg15[%c0_46, %c0_47], %123 {strides = array<i32>} : memref<2x2xf32, #tpu.memory_space<vmem>>, vector<2x2xf32>,
    } else {
    }
    return
  }
  func.func @transform_0(%arg0: i32, %arg1: i32) -> i32 {
    %c0_i32 = arith.constant 0 : i32
    %c0_i32_0 = arith.constant 0 : i32
    return %c0_i32 : i32
  }
  func.func @transform_1(%arg0: i32, %arg1: i32) -> (i32, i32) {
    %c0_i32 = arith.constant 0 : i32
    return %arg0, %arg1 : i32, i32
  }
  func.func @transform_2(%arg0: i32, %arg1: i32) -> (i32, i32) {
    %c0_i32 = arith.constant 0 : i32
    %c0_i32_0 = arith.constant 0 : i32
    return %arg1, %c0_i32 : i32, i32
  }
  func.func @transform_3(%arg0: i32, %arg1: i32) -> (i32, i32) {
    %c0_i32 = arith.constant 0 : i32
    %c0_i32_0 = arith.constant 0 : i32
    %c0_i32_1 = arith.constant 0 : i32
    return %c0_i32, %c0_i32_0 : i32, i32
  }
  func.func @transform_4(%arg0: i32, %arg1: i32) -> (i32, i32) {
    %c0_i32 = arith.constant 0 : i32
    %c0_i32_0 = arith.constant 0 : i32
    return %arg0, %c0_i32 : i32, i32
  }
  func.func @transform_5(%arg0: i32, %arg1: i32) -> (i32, i32) {
    %c0_i32 = arith.constant 0 : i32
    %c0_i32_0 = arith.constant 0 : i32
    %c0_i32_1 = arith.constant 0 : i32
    return %c0_i32, %c0_i32_0 : i32, i32
  }
  func.func @transform_6(%arg0: i32, %arg1: i32) -> (i32, i32) {
    %c0_i32 = arith.constant 0 : i32
    %c0_i32_0 = arith.constant 0 : i32
    %c0_i32_1 = arith.constant 0 : i32
    return %c0_i32, %c0_i32_0 : i32, i32
  }
  func.func @transform_7(%arg0: i32, %arg1: i32) -> (i32, i32) {
    %c0_i32 = arith.constant 0 : i32
    %c0_i32_0 = arith.constant 0 : i32
    %c0_i32_1 = arith.constant 0 : i32
    return %c0_i32, %c0_i32_0 : i32, i32
  }
  func.func @transform_8(%arg0: i32, %arg1: i32) -> (i32, i32) {
    %c0_i32 = arith.constant 0 : i32
    %c0_i32_0 = arith.constant 0 : i32
    %c0_i32_1 = arith.constant 0 : i32
    return %c0_i32, %c0_i32_0 : i32, i32
  }
  func.func @transform_9(%arg0: i32, %arg1: i32) -> (i32, i32) {
    %c0_i32 = arith.constant 0 : i32
    %c0_i32_0 = arith.constant 0 : i32
    %c0_i32_1 = arith.constant 0 : i32
    return %c0_i32, %c0_i32_0 : i32, i32
  }
  func.func @transform_10(%arg0: i32, %arg1: i32) -> (i32, i32) {
    %c0_i32 = arith.constant 0 : i32
    %c0_i32_0 = arith.constant 0 : i32
    %c0_i32_1 = arith.constant 0 : i32
    return %c0_i32, %c0_i32_0 : i32, i32
  }
  func.func @transform_11(%arg0: i32, %arg1: i32) -> (i32, i32) {
    %c0_i32 = arith.constant 0 : i32
    %c0_i32_0 = arith.constant 0 : i32
    %c0_i32_1 = arith.constant 0 : i32
    return %c0_i32, %c0_i32_0 : i32, i32
  }
  func.func @transform_12(%arg0: i32, %arg1: i32) -> (i32, i32) {
    %c0_i32 = arith.constant 0 : i32
    %c0_i32_0 = arith.constant 0 : i32
    %c0_i32_1 = arith.constant 0 : i32
    return %c0_i32, %c0_i32_0 : i32, i32
  }
  func.func @transform_13(%arg0: i32, %arg1: i32) -> (i32, i32) {
    %c0_i32 = arith.constant 0 : i32
    %c0_i32_0 = arith.constant 0 : i32
    return %arg0, %c0_i32 : i32, i32
  }
}

</mosaic_0001>

<llo_original>
// kernel: tpu_custom_call.1
$region0: #{tpu_custom_call.1}
  #allocation0 [shape = 'u32[]', space=smem, size = 0x4, offset = 0x4, fixed_abs, tag = 'smem constant byte address 0x4 - core index']
  #allocation1 [shape = 'u32[144,128]{1,0:T(1,128)}', space=vmem, size = 0x12000, scoped, tag = 'internal scratch']
  #allocation2 [shape = 'f32[2,64]{1,0:T(2,128)}', space=vmem, size = 0x400, scoped, tag = 'scratch operand']
  %s0 = inlined_call_operand.vmem [shape: f32[16], index: 0, kind: input, shape index: {}]
  %s1 = inlined_call_operand.vmem [shape: f32[2,1024], index: 1, kind: input, shape index: {}]
  %s2 = inlined_call_operand.vmem [shape: bf16[1024,64], index: 2, kind: input, shape index: {}]
  %s3 = inlined_call_operand.vmem [shape: f32[1,64], index: 3, kind: input, shape index: {}]
  %s4 = inlined_call_operand.vmem [shape: f32[2,8], index: 4, kind: input, shape index: {}]
  %s5 = inlined_call_operand.vmem [shape: bf16[8,64], index: 5, kind: input, shape index: {}]
  %s6 = inlined_call_operand.vmem [shape: f32[1,64], index: 6, kind: input, shape index: {}]
  %s7 = inlined_call_operand.vmem [shape: f32[64,30], index: 7, kind: input, shape index: {}]
  %s8 = inlined_call_operand.vmem [shape: f32[1,30], index: 8, kind: input, shape index: {}]
  %s9 = inlined_call_operand.vmem [shape: f32[1,30], index: 9, kind: input, shape index: {}]
  %s10 = inlined_call_operand.vmem [shape: f32[1,30], index: 10, kind: input, shape index: {}]
  %s11 = inlined_call_operand.vmem [shape: f32[30,2], index: 11, kind: input, shape index: {}]
  %s12 = inlined_call_operand.vmem [shape: f32[1,2], index: 12, kind: input, shape index: {}]
  %s13 = inlined_call_operand.hbm [shape: f32[2,2], index: 13, kind: output, shape index: {}]
  %s14 = sld [smem:[#allocation0]]
  $region97: #{tpu_custom_call.1} parent=0
    _
  %s16 = ssub.s32 1, %s14
  %s17 = scalar_select 0, %s16, %s14
  $region1: #{tpu_custom_call.1} parent=0
    #allocation3 [shape = 'u8[512]{0}', space=smem, size = 0x200, scoped, tag = 'input window, operand 0, single buffered']
    #allocation4 [shape = 's32[2]{0}', space=sflag, size = 0x8, scoped, tag = 'scoped memory for tpu_custom_call.1']
    #allocation5 [shape = 's32[2]{0}', space=sflag, size = 0x8, scoped, tag = 'scoped memory for tpu_custom_call.1']
    #allocation6 [shape = 'u8[1024]{0}', space=vmem, size = 0x400, scoped, tag = 'output window, operand 0, single buffered']
    %18 = vsyncpa [#allocation5], 0
    %19 = vsyncpa [#allocation4], 0
    loop: start=0, step=1, limit=4
    $region2: #{tpu_custom_call.1} parent=1 // loop_pre_header
      _
    $region3: #{tpu_custom_call.1} parent=1 // loop_header
      %s21 = sphi 0, %s25
      %p22 = scmp.ge.s32.totalorder %s21, 4
      %s28 = sphi 0, %s40
      %s29 = sphi 0, %s36
      %s30 = sphi 0, %s28
      %s31 = sphi 0, %s29
      %s32 = sphi 0, %s30
      %s33 = sphi 0, %s31
      %s41 = sphi 0, %s41
      %s43 = sphi 0, %s41
      %s44 = sphi 0, %s43
      %s58 = sphi 0, %s44
      %s66 = sphi 0, %s68
      %s69 = sphi 0, %s66
      %s70 = sphi 0, %s69
      %s86 = sphi 0, %s70
      %s92 = sphi 0, %s94
      %s95 = sphi 0, %s92
      %s96 = sphi 0, %s95
      %s112 = sphi 0, %s96
      %s116 = sphi 0, %s116
      %s118 = sphi 0, %s116
      %s119 = sphi 0, %s118
      %s133 = sphi 0, %s119
      %s139 = sphi 0, %s141
      %s142 = sphi 0, %s139
      %s143 = sphi 0, %s142
      %s159 = sphi 0, %s143
      %s163 = sphi 0, %s163
      %s165 = sphi 0, %s163
      %s166 = sphi 0, %s165
      %s180 = sphi 0, %s166
      %s184 = sphi 0, %s184
      %s186 = sphi 0, %s184
      %s187 = sphi 0, %s186
      %s201 = sphi 0, %s187
      %s205 = sphi 0, %s205
      %s207 = sphi 0, %s205
      %s208 = sphi 0, %s207
      %s222 = sphi 0, %s208
      %s226 = sphi 0, %s226
      %s228 = sphi 0, %s226
      %s229 = sphi 0, %s228
      %s243 = sphi 0, %s229
      %s247 = sphi 0, %s247
      %s249 = sphi 0, %s247
      %s250 = sphi 0, %s249
      %s264 = sphi 0, %s250
      %s268 = sphi 0, %s268
      %s270 = sphi 0, %s268
      %s271 = sphi 0, %s270
      %s285 = sphi 0, %s271
      %s289 = sphi 0, %s289
      %s291 = sphi 0, %s289
      %s292 = sphi 0, %s291
      %s306 = sphi 0, %s292
      %s310 = sphi 0, %s310
      %s312 = sphi 0, %s310
      %s313 = sphi 0, %s312
      %s327 = sphi 0, %s313
      %s333 = sphi 0, %s335
      %s336 = sphi 0, %s333
      %s337 = sphi 0, %s336
      %s353 = sphi 0, %s337
    $region4: #{tpu_custom_call.1} parent=1 // loop_header_branch
      %24 = sbr.rel (%p22) target = $region8
    $region5: #{tpu_custom_call.1} parent=1 // loop_body
      %s26 = ssub.s32 %s21, 1
      %s27 = ssub.s32 %s21, 2
      %s34 = sadd.s32 1, %s29
      %p35 = scmp.ge.s32.totalorder %s34, 2
      %s36 = scalar_select %p35, 0, %s34
      %s37 = sadd.s32 1, %s28
      %s38 = scalar_select %p35, %s37, %s28
      %p39 = scmp.ge.s32.totalorder %s38, 1
      %s40 = scalar_select %p39, 0, %s38
      %s42 = sadd.s32 %s41, 1
      %p45 = scmp.eq.s32.totalorder %s21, 1
      %p46 = scmp.ne.s32.totalorder %s41, %s43
      %p47 = scmp.eq.s32.totalorder %s21, 0
      %p48 = por %p46, %p47
      %p49 = scmp.ne.s32.totalorder %s41, %s43
      %p50 = scmp.eq.s32.totalorder %s26, 1
      %p51 = por %p49, %p50
      %p52 = scmp.ne.s32.totalorder %s43, %s44
      %p53 = scmp.eq.s32.totalorder %s26, 0
      %p54 = por %p52, %p53
      %p55 = scmp.ne.s32.totalorder %s43, %s44
      %p56 = scmp.eq.s32.totalorder %s27, 1
      %p57 = por %p55, %p56
      %p59 = scmp.ne.s32.totalorder %s44, %s58
      %p60 = scmp.eq.s32.totalorder %s27, 0
      %p61 = por %p59, %p60
      %s62 = ssub.s32 %s28, %s40
      %s63 = ssub.s32 %s29, %s36
      %s64 = sor.u32 %s62, %s63
      %p65 = scmp.eq.s32.totalorder %s64, 0
      %s67 = sadd.s32 %s66, 1
      %s68 = scalar_select %p65, %s66, %s67
      %p71 = pneg %p65
      %p72 = scmp.eq.s32.totalorder %s21, 1
      %p73 = por %p71, %p72
      %p74 = scmp.ne.s32.totalorder %s66, %s69
      %p75 = scmp.eq.s32.totalorder %s21, 0
      %p76 = por %p74, %p75
      %p77 = scmp.ne.s32.totalorder %s66, %s69
      %p78 = scmp.eq.s32.totalorder %s26, 1
      %p79 = por %p77, %p78
      %p80 = scmp.ne.s32.totalorder %s69, %s70
      %p81 = scmp.eq.s32.totalorder %s26, 0
      %p82 = por %p80, %p81
      %p83 = scmp.ne.s32.totalorder %s69, %s70
      %p84 = scmp.eq.s32.totalorder %s27, 1
      %p85 = por %p83, %p84
      %p87 = scmp.ne.s32.totalorder %s70, %s86
      %p88 = scmp.eq.s32.totalorder %s27, 0
      %p89 = por %p87, %p88
      %s90 = ssub.s32 %s29, %s36
      %p91 = scmp.eq.s32.totalorder %s90, 0
      %s93 = sadd.s32 %s92, 1
      %s94 = scalar_select %p91, %s92, %s93
      %p97 = pneg %p91
      %p98 = scmp.eq.s32.totalorder %s21, 1
      %p99 = por %p97, %p98
      %p100 = scmp.ne.s32.totalorder %s92, %s95
      %p101 = scmp.eq.s32.totalorder %s21, 0
      %p102 = por %p100, %p101
      %p103 = scmp.ne.s32.totalorder %s92, %s95
      %p104 = scmp.eq.s32.totalorder %s26, 1
      %p105 = por %p103, %p104
      %p106 = scmp.ne.s32.totalorder %s95, %s96
      %p107 = scmp.eq.s32.totalorder %s26, 0
      %p108 = por %p106, %p107
      %p109 = scmp.ne.s32.totalorder %s95, %s96
      %p110 = scmp.eq.s32.totalorder %s27, 1
      %p111 = por %p109, %p110
      %p113 = scmp.ne.s32.totalorder %s96, %s112
      %p114 = scmp.eq.s32.totalorder %s27, 0
      %p115 = por %p113, %p114
      %s117 = sadd.s32 %s116, 1
      %p120 = scmp.eq.s32.totalorder %s21, 1
      %p121 = scmp.ne.s32.totalorder %s116, %s118
      %p122 = scmp.eq.s32.totalorder %s21, 0
      %p123 = por %p121, %p122
      %p124 = scmp.ne.s32.totalorder %s116, %s118
      %p125 = scmp.eq.s32.totalorder %s26, 1
      %p126 = por %p124, %p125
      %p127 = scmp.ne.s32.totalorder %s118, %s119
      %p128 = scmp.eq.s32.totalorder %s26, 0
      %p129 = por %p127, %p128
      %p130 = scmp.ne.s32.totalorder %s118, %s119
      %p131 = scmp.eq.s32.totalorder %s27, 1
      %p132 = por %p130, %p131
      %p134 = scmp.ne.s32.totalorder %s119, %s133
      %p135 = scmp.eq.s32.totalorder %s27, 0
      %p136 = por %p134, %p135
      %s137 = ssub.s32 %s28, %s40
      %p138 = scmp.eq.s32.totalorder %s137, 0
      %s140 = sadd.s32 %s139, 1
      %s141 = scalar_select %p138, %s139, %s140
      %p144 = pneg %p138
      %p145 = scmp.eq.s32.totalorder %s21, 1
      %p146 = por %p144, %p145
      %p147 = scmp.ne.s32.totalorder %s139, %s142
      %p148 = scmp.eq.s32.totalorder %s21, 0
      %p149 = por %p147, %p148
      %p150 = scmp.ne.s32.totalorder %s139, %s142
      %p151 = scmp.eq.s32.totalorder %s26, 1
      %p152 = por %p150, %p151
      %p153 = scmp.ne.s32.totalorder %s142, %s143
      %p154 = scmp.eq.s32.totalorder %s26, 0
      %p155 = por %p153, %p154
      %p156 = scmp.ne.s32.totalorder %s142, %s143
      %p157 = scmp.eq.s32.totalorder %s27, 1
      %p158 = por %p156, %p157
      %p160 = scmp.ne.s32.totalorder %s143, %s159
      %p161 = scmp.eq.s32.totalorder %s27, 0
      %p162 = por %p160, %p161
      %s164 = sadd.s32 %s163, 1
      %p167 = scmp.eq.s32.totalorder %s21, 1
      %p168 = scmp.ne.s32.totalorder %s163, %s165
      %p169 = scmp.eq.s32.totalorder %s21, 0
      %p170 = por %p168, %p169
      %p171 = scmp.ne.s32.totalorder %s163, %s165
      %p172 = scmp.eq.s32.totalorder %s26, 1
      %p173 = por %p171, %p172
      %p174 = scmp.ne.s32.totalorder %s165, %s166
      %p175 = scmp.eq.s32.totalorder %s26, 0
      %p176 = por %p174, %p175
      %p177 = scmp.ne.s32.totalorder %s165, %s166
      %p178 = scmp.eq.s32.totalorder %s27, 1
      %p179 = por %p177, %p178
      %p181 = scmp.ne.s32.totalorder %s166, %s180
      %p182 = scmp.eq.s32.totalorder %s27, 0
      %p183 = por %p181, %p182
      %s185 = sadd.s32 %s184, 1
      %p188 = scmp.eq.s32.totalorder %s21, 1
      %p189 = scmp.ne.s32.totalorder %s184, %s186
      %p190 = scmp.eq.s32.totalorder %s21, 0
      %p191 = por %p189, %p190
      %p192 = scmp.ne.s32.totalorder %s184, %s186
      %p193 = scmp.eq.s32.totalorder %s26, 1
      %p194 = por %p192, %p193
      %p195 = scmp.ne.s32.totalorder %s186, %s187
      %p196 = scmp.eq.s32.totalorder %s26, 0
      %p197 = por %p195, %p196
      %p198 = scmp.ne.s32.totalorder %s186, %s187
      %p199 = scmp.eq.s32.totalorder %s27, 1
      %p200 = por %p198, %p199
      %p202 = scmp.ne.s32.totalorder %s187, %s201
      %p203 = scmp.eq.s32.totalorder %s27, 0
      %p204 = por %p202, %p203
      %s206 = sadd.s32 %s205, 1
      %p209 = scmp.eq.s32.totalorder %s21, 1
      %p210 = scmp.ne.s32.totalorder %s205, %s207
      %p211 = scmp.eq.s32.totalorder %s21, 0
      %p212 = por %p210, %p211
      %p213 = scmp.ne.s32.totalorder %s205, %s207
      %p214 = scmp.eq.s32.totalorder %s26, 1
      %p215 = por %p213, %p214
      %p216 = scmp.ne.s32.totalorder %s207, %s208
      %p217 = scmp.eq.s32.totalorder %s26, 0
      %p218 = por %p216, %p217
      %p219 = scmp.ne.s32.totalorder %s207, %s208
      %p220 = scmp.eq.s32.totalorder %s27, 1
      %p221 = por %p219, %p220
      %p223 = scmp.ne.s32.totalorder %s208, %s222
      %p224 = scmp.eq.s32.totalorder %s27, 0
      %p225 = por %p223, %p224
      %s227 = sadd.s32 %s226, 1
      %p230 = scmp.eq.s32.totalorder %s21, 1
      %p231 = scmp.ne.s32.totalorder %s226, %s228
      %p232 = scmp.eq.s32.totalorder %s21, 0
      %p233 = por %p231, %p232
      %p234 = scmp.ne.s32.totalorder %s226, %s228
      %p235 = scmp.eq.s32.totalorder %s26, 1
      %p236 = por %p234, %p235
      %p237 = scmp.ne.s32.totalorder %s228, %s229
      %p238 = scmp.eq.s32.totalorder %s26, 0
      %p239 = por %p237, %p238
      %p240 = scmp.ne.s32.totalorder %s228, %s229
      %p241 = scmp.eq.s32.totalorder %s27, 1
      %p242 = por %p240, %p241
      %p244 = scmp.ne.s32.totalorder %s229, %s243
      %p245 = scmp.eq.s32.totalorder %s27, 0
      %p246 = por %p244, %p245
      %s248 = sadd.s32 %s247, 1
      %p251 = scmp.eq.s32.totalorder %s21, 1
      %p252 = scmp.ne.s32.totalorder %s247, %s249
      %p253 = scmp.eq.s32.totalorder %s21, 0
      %p254 = por %p252, %p253
      %p255 = scmp.ne.s32.totalorder %s247, %s249
      %p256 = scmp.eq.s32.totalorder %s26, 1
      %p257 = por %p255, %p256
      %p258 = scmp.ne.s32.totalorder %s249, %s250
      %p259 = scmp.eq.s32.totalorder %s26, 0
      %p260 = por %p258, %p259
      %p261 = scmp.ne.s32.totalorder %s249, %s250
      %p262 = scmp.eq.s32.totalorder %s27, 1
      %p263 = por %p261, %p262
      %p265 = scmp.ne.s32.totalorder %s250, %s264
      %p266 = scmp.eq.s32.totalorder %s27, 0
      %p267 = por %p265, %p266
      %s269 = sadd.s32 %s268, 1
      %p272 = scmp.eq.s32.totalorder %s21, 1
      %p273 = scmp.ne.s32.totalorder %s268, %s270
      %p274 = scmp.eq.s32.totalorder %s21, 0
      %p275 = por %p273, %p274
      %p276 = scmp.ne.s32.totalorder %s268, %s270
      %p277 = scmp.eq.s32.totalorder %s26, 1
      %p278 = por %p276, %p277
      %p279 = scmp.ne.s32.totalorder %s270, %s271
      %p280 = scmp.eq.s32.totalorder %s26, 0
      %p281 = por %p279, %p280
      %p282 = scmp.ne.s32.totalorder %s270, %s271
      %p283 = scmp.eq.s32.totalorder %s27, 1
      %p284 = por %p282, %p283
      %p286 = scmp.ne.s32.totalorder %s271, %s285
      %p287 = scmp.eq.s32.totalorder %s27, 0
      %p288 = por %p286, %p287
      %s290 = sadd.s32 %s289, 1
      %p293 = scmp.eq.s32.totalorder %s21, 1
      %p294 = scmp.ne.s32.totalorder %s289, %s291
      %p295 = scmp.eq.s32.totalorder %s21, 0
      %p296 = por %p294, %p295
      %p297 = scmp.ne.s32.totalorder %s289, %s291
      %p298 = scmp.eq.s32.totalorder %s26, 1
      %p299 = por %p297, %p298
      %p300 = scmp.ne.s32.totalorder %s291, %s292
      %p301 = scmp.eq.s32.totalorder %s26, 0
      %p302 = por %p300, %p301
      %p303 = scmp.ne.s32.totalorder %s291, %s292
      %p304 = scmp.eq.s32.totalorder %s27, 1
      %p305 = por %p303, %p304
      %p307 = scmp.ne.s32.totalorder %s292, %s306
      %p308 = scmp.eq.s32.totalorder %s27, 0
      %p309 = por %p307, %p308
      %s311 = sadd.s32 %s310, 1
      %p314 = scmp.eq.s32.totalorder %s21, 1
      %p315 = scmp.ne.s32.totalorder %s310, %s312
      %p316 = scmp.eq.s32.totalorder %s21, 0
      %p317 = por %p315, %p316
      %p318 = scmp.ne.s32.totalorder %s310, %s312
      %p319 = scmp.eq.s32.totalorder %s26, 1
      %p320 = por %p318, %p319
      %p321 = scmp.ne.s32.totalorder %s312, %s313
      %p322 = scmp.eq.s32.totalorder %s26, 0
      %p323 = por %p321, %p322
      %p324 = scmp.ne.s32.totalorder %s312, %s313
      %p325 = scmp.eq.s32.totalorder %s27, 1
      %p326 = por %p324, %p325
      %p328 = scmp.ne.s32.totalorder %s313, %s327
      %p329 = scmp.eq.s32.totalorder %s27, 0
      %p330 = por %p328, %p329
      %s331 = ssub.s32 %s28, %s40
      %p332 = scmp.eq.s32.totalorder %s331, 0
      %s334 = sadd.s32 %s333, 1
      %s335 = scalar_select %p332, %s333, %s334
      %p338 = pneg %p332
      %p339 = scmp.eq.s32.totalorder %s21, 1
      %p340 = por %p338, %p339
      %p341 = scmp.ne.s32.totalorder %s333, %s336
      %p342 = scmp.eq.s32.totalorder %s21, 0
      %p343 = por %p341, %p342
      %p344 = scmp.ne.s32.totalorder %s333, %s336
      %p345 = scmp.eq.s32.totalorder %s26, 1
      %p346 = por %p344, %p345
      %p347 = scmp.ne.s32.totalorder %s336, %s337
      %p348 = scmp.eq.s32.totalorder %s26, 0
      %p349 = por %p347, %p348
      %p350 = scmp.ne.s32.totalorder %s336, %s337
      %p351 = scmp.eq.s32.totalorder %s27, 1
      %p352 = por %p350, %p351
      %p354 = scmp.ne.s32.totalorder %s337, %s353
      %p355 = scmp.eq.s32.totalorder %s27, 0
      %p356 = por %p354, %p355
      %p357 = scmp.le.s32.totalorder 1, %s21
      %p358 = scmp.lt.s32.totalorder %s21, 3
      %p359 = pnand %p357, %p358
      %p360 = pneg %p359
      // Predicated region
      $region9: #{tpu_custom_call.1} parent=5 // pred_check
        _
      $region10: #{tpu_custom_call.1} parent=5 // pred_check_branch
        %362 = sbr.rel (%p359) target = $region12
      $region11: #{tpu_custom_call.1} parent=5 // pred_region
        %s363 = ssub.s32 %s21, 1
        // Predicated region
        $region13: #{tpu_custom_call.1} parent=11 // pred_check
          %p364 = pneg %p54
        $region14: #{tpu_custom_call.1} parent=11 // pred_check_branch
          %366 = sbr.rel (%p364) target = $region16
        $region15: #{tpu_custom_call.1} parent=11 // pred_region
          %s368 = ssub.s32 16, 16
          %369 = vsyncadd [#allocation5], %s368
          %s371 = sshll.u32 %s0, 4
          %s372 = int_to_ptr.vmem [resolvable:$true] %s371
          %374 = dma.vmem_to_smem %s372, 16, [#allocation3], [#allocation5]
        $region16: #{tpu_custom_call.1} parent=11 // pred_fallthru
          _
        // Predicated region
        $region17: #{tpu_custom_call.1} parent=11 // pred_check
          %p375 = pneg %p129
        $region18: #{tpu_custom_call.1} parent=11 // pred_check_branch
          %377 = sbr.rel (%p375) target = $region20
        $region19: #{tpu_custom_call.1} parent=11 // pred_region
          _
        $region20: #{tpu_custom_call.1} parent=11 // pred_fallthru
          _
        // Predicated region
        $region21: #{tpu_custom_call.1} parent=11 // pred_check
          %p378 = pneg %p155
        $region22: #{tpu_custom_call.1} parent=11 // pred_check_branch
          %380 = sbr.rel (%p378) target = $region24
        $region23: #{tpu_custom_call.1} parent=11 // pred_region
          %p381 = scmp.lt.s32.totalorder %s30, 0
          %s382 = scalar_select %p381, %s30, 0
          %s383 = smul.addr %s382, 2
          %s384 = scalar_lea.vmem %s4, %s383
        $region24: #{tpu_custom_call.1} parent=11 // pred_fallthru
          _
        // Predicated region
        $region25: #{tpu_custom_call.1} parent=11 // pred_check
          %p385 = pneg %p176
        $region26: #{tpu_custom_call.1} parent=11 // pred_check_branch
          %387 = sbr.rel (%p385) target = $region28
        $region27: #{tpu_custom_call.1} parent=11 // pred_region
          _
        $region28: #{tpu_custom_call.1} parent=11 // pred_fallthru
          _
        // Predicated region
        $region29: #{tpu_custom_call.1} parent=11 // pred_check
          %p388 = pneg %p197
        $region30: #{tpu_custom_call.1} parent=11 // pred_check_branch
          %390 = sbr.rel (%p388) target = $region32
        $region31: #{tpu_custom_call.1} parent=11 // pred_region
          _
        $region32: #{tpu_custom_call.1} parent=11 // pred_fallthru
          _
        // Predicated region
        $region33: #{tpu_custom_call.1} parent=11 // pred_check
          %p391 = pneg %p218
        $region34: #{tpu_custom_call.1} parent=11 // pred_check_branch
          %393 = sbr.rel (%p391) target = $region36
        $region35: #{tpu_custom_call.1} parent=11 // pred_region
          _
        $region36: #{tpu_custom_call.1} parent=11 // pred_fallthru
          _
        // Predicated region
        $region37: #{tpu_custom_call.1} parent=11 // pred_check
          %p394 = pneg %p239
        $region38: #{tpu_custom_call.1} parent=11 // pred_check_branch
          %396 = sbr.rel (%p394) target = $region40
        $region39: #{tpu_custom_call.1} parent=11 // pred_region
          _
        $region40: #{tpu_custom_call.1} parent=11 // pred_fallthru
          _
        // Predicated region
        $region41: #{tpu_custom_call.1} parent=11 // pred_check
          %p397 = pneg %p260
        $region42: #{tpu_custom_call.1} parent=11 // pred_check_branch
          %399 = sbr.rel (%p397) target = $region44
        $region43: #{tpu_custom_call.1} parent=11 // pred_region
          _
        $region44: #{tpu_custom_call.1} parent=11 // pred_fallthru
          _
        // Predicated region
        $region45: #{tpu_custom_call.1} parent=11 // pred_check
          %p400 = pneg %p281
        $region46: #{tpu_custom_call.1} parent=11 // pred_check_branch
          %402 = sbr.rel (%p400) target = $region48
        $region47: #{tpu_custom_call.1} parent=11 // pred_region
          _
        $region48: #{tpu_custom_call.1} parent=11 // pred_fallthru
          _
        // Predicated region
        $region49: #{tpu_custom_call.1} parent=11 // pred_check
          %p403 = pneg %p302
        $region50: #{tpu_custom_call.1} parent=11 // pred_check_branch
          %405 = sbr.rel (%p403) target = $region52
        $region51: #{tpu_custom_call.1} parent=11 // pred_region
          _
        $region52: #{tpu_custom_call.1} parent=11 // pred_fallthru
          _
        // Predicated region
        $region53: #{tpu_custom_call.1} parent=11 // pred_check
          %p406 = pneg %p323
        $region54: #{tpu_custom_call.1} parent=11 // pred_check_branch
          %408 = sbr.rel (%p406) target = $region56
        $region55: #{tpu_custom_call.1} parent=11 // pred_region
          _
        $region56: #{tpu_custom_call.1} parent=11 // pred_fallthru
          _
      $region12: #{tpu_custom_call.1} parent=5 // pred_fallthru
        _
      %p409 = scmp.lt.s32.totalorder %s21, 2
      // Predicated region
      $region57: #{tpu_custom_call.1} parent=5 // pred_check
        %p410 = pneg %p409
      $region58: #{tpu_custom_call.1} parent=5 // pred_check_branch
        %412 = sbr.rel (%p410) target = $region60
      $region59: #{tpu_custom_call.1} parent=5 // pred_region
        // Predicated region
        $region61: #{tpu_custom_call.1} parent=59 // pred_check
          %p413 = pneg %p76
        $region62: #{tpu_custom_call.1} parent=59 // pred_check_branch
          %415 = sbr.rel (%p413) target = $region64
        $region63: #{tpu_custom_call.1} parent=59 // pred_region
          %s416 = smul.u32 4, %s29
          %p417 = scmp.lt.s32.totalorder %s28, 0
          %s418 = scalar_select %p417, %s28, 0
          %p419 = scmp.lt.s32.totalorder %s416, 7
          %s420 = scalar_select %p419, %s416, 7
          %s421 = smul.addr %s418, 8
          %s422 = sadd.s32 %s420, %s421
          %s423 = smul.addr %s422, 2
          %s424 = scalar_lea.vmem %s1, %s423
          %s425 = smul.u32 4, %s29
        $region64: #{tpu_custom_call.1} parent=59 // pred_fallthru
          _
        // Predicated region
        $region65: #{tpu_custom_call.1} parent=59 // pred_check
          %p426 = pneg %p102
        $region66: #{tpu_custom_call.1} parent=59 // pred_check_branch
          %428 = sbr.rel (%p426) target = $region68
        $region67: #{tpu_custom_call.1} parent=59 // pred_region
          %s429 = smul.u32 64, %s29
          %p430 = scmp.lt.s32.totalorder %s429, 127
          %s431 = scalar_select %p430, %s429, 127
          %s432 = smul.addr %s431, 4
          %s433 = scalar_lea.vmem %s2, %s432
          %s434 = smul.u32 64, %s29
        $region68: #{tpu_custom_call.1} parent=59 // pred_fallthru
          _
      $region60: #{tpu_custom_call.1} parent=5 // pred_fallthru
        _
      %p435 = scmp.le.s32.totalorder 1, %s21
      %p436 = scmp.lt.s32.totalorder %s21, 3
      %p437 = pnand %p435, %p436
      %p438 = pneg %p437
      // Predicated region
      $region69: #{tpu_custom_call.1} parent=5 // pred_check
        _
      $region70: #{tpu_custom_call.1} parent=5 // pred_check_branch
        %440 = sbr.rel (%p437) target = $region72
      $region71: #{tpu_custom_call.1} parent=5 // pred_region
        %s441 = ssub.s32 %s21, 1
        // Predicated region
        $region73: #{tpu_custom_call.1} parent=71 // pred_check
          %p442 = pneg %p54
        $region74: #{tpu_custom_call.1} parent=71 // pred_check_branch
          %444 = sbr.rel (%p442) target = $region76
        $region75: #{tpu_custom_call.1} parent=71 // pred_region
          %445 = dma.done [#allocation5], 16
        $region76: #{tpu_custom_call.1} parent=71 // pred_fallthru
          _
        %446 = sfence
        %p447 = pneg %p54
        %p448 = pneg %p51
        %s449 = smul.u32 4, %s31
        %p450 = scmp.lt.s32.totalorder %s30, 0
        %s451 = scalar_select %p450, %s30, 0
        %p452 = scmp.lt.s32.totalorder %s449, 7
        %s453 = scalar_select %p452, %s449, 7
        %s454 = smul.addr %s451, 8
        %s455 = sadd.s32 %s453, %s454
        %s456 = smul.addr %s455, 2
        %s457 = scalar_lea.vmem %s1, %s456
        %p458 = pneg %p82
        %p459 = pneg %p79
        %s460 = smul.u32 64, %s31
        %p461 = scmp.lt.s32.totalorder %s460, 127
        %s462 = scalar_select %p461, %s460, 127
        %s463 = smul.addr %s462, 4
        %s464 = scalar_lea.vmem %s2, %s463
        %p465 = pneg %p108
        %p466 = pneg %p105
        %p467 = pneg %p129
        %p468 = pneg %p126
        %p469 = scmp.lt.s32.totalorder %s30, 0
        %s470 = scalar_select %p469, %s30, 0
        %s471 = smul.addr %s470, 2
        %s472 = scalar_lea.vmem %s4, %s471
        %p473 = pneg %p155
        %p474 = pneg %p152
        %p475 = pneg %p176
        %p476 = pneg %p173
        %p477 = pneg %p197
        %p478 = pneg %p194
        %p479 = pneg %p218
        %p480 = pneg %p215
        %p481 = pneg %p239
        %p482 = pneg %p236
        %p483 = pneg %p260
        %p484 = pneg %p257
        %p485 = pneg %p281
        %p486 = pneg %p278
        %p487 = pneg %p302
        %p488 = pneg %p299
        %p489 = pneg %p323
        %p490 = pneg %p320
        %p491 = pneg %p349
        %p492 = pneg %p346
        %s493 = smul.u32 4, %s31
        %p494 = scmp.lt.s32.totalorder %s30, 0
        %s495 = scalar_select %p494, %s30, 0
        %p496 = scmp.lt.s32.totalorder %s493, 7
        %s497 = scalar_select %p496, %s493, 7
        %s498 = smul.addr %s495, 8
        %s499 = sadd.s32 %s497, %s498
        %s500 = smul.addr %s499, 2
        %s501 = scalar_lea.vmem %s1, %s500
        %s502 = smul.u32 4, %s31
        %s503 = smul.u32 64, %s31
        %p504 = scmp.lt.s32.totalorder %s503, 127
        %s505 = scalar_select %p504, %s503, 127
        %s506 = smul.addr %s505, 4
        %s507 = scalar_lea.vmem %s2, %s506
        %s508 = smul.u32 64, %s31
        %p509 = scmp.lt.s32.totalorder %s30, 0
        %s510 = scalar_select %p509, %s30, 0
        %s511 = smul.addr %s510, 2
        %s512 = scalar_lea.vmem %s4, %s511
        %p514 = scmp.eq.s32.totalorder %s31, 0
        // Predicated region
        $region77: #{tpu_custom_call.1} parent=71 // pred_check
          %p515 = pneg %p514
        $region78: #{tpu_custom_call.1} parent=71 // pred_check_branch
          %517 = sbr.rel (%p515) target = $region80
        $region79: #{tpu_custom_call.1} parent=71 // pred_region
          %vm518 = vcmask 517120
          %519 = vst.msk [vmem:[#allocation2] sm:$0x3] %vm518, 0.0
        $region80: #{tpu_custom_call.1} parent=71 // pred_fallthru
          _
        %v520 = vld [vmem:[#allocation2] sm:$0x3]
        %v521 = vld [vmem:[%s501] sm:$0xff]
        %v523 = vcombine.high %v521, %v521
        %v525 = vunpack.c.l.s4 1983009808
        %v526 = vunpack.c.0.s8 %v525
        %v527 = vlaneseq
        %v528 = vshrl.u32 %v527, 7
        %v529 = vsub.s32 %v526, %v528
        %v530 = vrot.slane %v521, %v529
        %v532 = vunpack.c.l.s4 1983009808
        %v533 = vunpack.c.0.s8 %v532
        %v534 = vlaneseq
        %v535 = vshrl.u32 %v534, 7
        %v536 = vsub.s32 %v533, %v535
        %v537 = vrot.slane %v523, %v536
        %v538 = vcombine.high %v530, %v530
        %v539 = vcombine.high %v537, %v537
        %v544 = vpack.c.bf16 %v530, %v530
        %v545 = vpack.c.bf16 %v538, %v538
        %v546 = vpack.c.bf16 %v537, %v537
        %v547 = vpack.c.bf16 %v539, %v539
        %v548 = vld [vmem:[%s507] sm:$0xf]
        %v549 = vld [vmem:[%s507 + $0x4] sm:$0xf]
        %v550 = vld [vmem:[%s507 + $0x8] sm:$0xf]
        %v551 = vld [vmem:[%s507 + $0xc] sm:$0xf]
        %v552 = vld [vmem:[%s507 + $0x10] sm:$0xf]
        %v553 = vld [vmem:[%s507 + $0x14] sm:$0xf]
        %v554 = vld [vmem:[%s507 + $0x18] sm:$0xf]
        %v555 = vld [vmem:[%s507 + $0x1c] sm:$0xf]
        %v556 = vld [vmem:[%s507 + $0x20] sm:$0xf]
        %v557 = vld [vmem:[%s507 + $0x24] sm:$0xf]
        %v558 = vld [vmem:[%s507 + $0x28] sm:$0xf]
        %v559 = vld [vmem:[%s507 + $0x2c] sm:$0xf]
        %v560 = vld [vmem:[%s507 + $0x30] sm:$0xf]
        %v561 = vld [vmem:[%s507 + $0x34] sm:$0xf]
        %v562 = vld [vmem:[%s507 + $0x38] sm:$0xf]
        %v563 = vld [vmem:[%s507 + $0x3c] sm:$0xf]
        %v564 = vld [vmem:[%s507 + $0x40] sm:$0xf]
        %v565 = vld [vmem:[%s507 + $0x44] sm:$0xf]
        %v566 = vld [vmem:[%s507 + $0x48] sm:$0xf]
        %v567 = vld [vmem:[%s507 + $0x4c] sm:$0xf]
        %v568 = vld [vmem:[%s507 + $0x50] sm:$0xf]
        %v569 = vld [vmem:[%s507 + $0x54] sm:$0xf]
        %v570 = vld [vmem:[%s507 + $0x58] sm:$0xf]
        %v571 = vld [vmem:[%s507 + $0x5c] sm:$0xf]
        %v572 = vld [vmem:[%s507 + $0x60] sm:$0xf]
        %v573 = vld [vmem:[%s507 + $0x64] sm:$0xf]
        %v574 = vld [vmem:[%s507 + $0x68] sm:$0xf]
        %v575 = vld [vmem:[%s507 + $0x6c] sm:$0xf]
        %v576 = vld [vmem:[%s507 + $0x70] sm:$0xf]
        %v577 = vld [vmem:[%s507 + $0x74] sm:$0xf]
        %v578 = vld [vmem:[%s507 + $0x78] sm:$0xf]
        %v579 = vld [vmem:[%s507 + $0x7c] sm:$0xf]
        %v580 = vld [vmem:[%s507 + $0x80] sm:$0xf]
        %v581 = vld [vmem:[%s507 + $0x84] sm:$0xf]
        %v582 = vld [vmem:[%s507 + $0x88] sm:$0xf]
        %v583 = vld [vmem:[%s507 + $0x8c] sm:$0xf]
        %v584 = vld [vmem:[%s507 + $0x90] sm:$0xf]
        %v585 = vld [vmem:[%s507 + $0x94] sm:$0xf]
        %v586 = vld [vmem:[%s507 + $0x98] sm:$0xf]
        %v587 = vld [vmem:[%s507 + $0x9c] sm:$0xf]
        %v588 = vld [vmem:[%s507 + $0xa0] sm:$0xf]
        %v589 = vld [vmem:[%s507 + $0xa4] sm:$0xf]
        %v590 = vld [vmem:[%s507 + $0xa8] sm:$0xf]
        %v591 = vld [vmem:[%s507 + $0xac] sm:$0xf]
        %v592 = vld [vmem:[%s507 + $0xb0] sm:$0xf]
        %v593 = vld [vmem:[%s507 + $0xb4] sm:$0xf]
        %v594 = vld [vmem:[%s507 + $0xb8] sm:$0xf]
        %v595 = vld [vmem:[%s507 + $0xbc] sm:$0xf]
        %v596 = vld [vmem:[%s507 + $0xc0] sm:$0xf]
        %v597 = vld [vmem:[%s507 + $0xc4] sm:$0xf]
        %v598 = vld [vmem:[%s507 + $0xc8] sm:$0xf]
        %v599 = vld [vmem:[%s507 + $0xcc] sm:$0xf]
        %v600 = vld [vmem:[%s507 + $0xd0] sm:$0xf]
        %v601 = vld [vmem:[%s507 + $0xd4] sm:$0xf]
        %v602 = vld [vmem:[%s507 + $0xd8] sm:$0xf]
        %v603 = vld [vmem:[%s507 + $0xdc] sm:$0xf]
        %v604 = vld [vmem:[%s507 + $0xe0] sm:$0xf]
        %v605 = vld [vmem:[%s507 + $0xe4] sm:$0xf]
        %v606 = vld [vmem:[%s507 + $0xe8] sm:$0xf]
        %v607 = vld [vmem:[%s507 + $0xec] sm:$0xf]
        %v608 = vld [vmem:[%s507 + $0xf0] sm:$0xf]
        %v609 = vld [vmem:[%s507 + $0xf4] sm:$0xf]
        %v610 = vld [vmem:[%s507 + $0xf8] sm:$0xf]
        %v611 = vld [vmem:[%s507 + $0xfc] sm:$0xf]
        %v676 = vunpack.c.l.b16 %v548
        %v677 = vunpack.c.l.b16 %v549
        %v678 = vunpack.c.l.b16 %v550
        %v679 = vunpack.c.l.b16 %v551
        %v680 = vunpack.c.l.b16 %v552
        %v681 = vunpack.c.l.b16 %v553
        %v682 = vunpack.c.l.b16 %v554
        %v683 = vunpack.c.l.b16 %v555
        %v684 = vunpack.c.l.b16 %v556
        %v685 = vunpack.c.l.b16 %v557
        %v686 = vunpack.c.l.b16 %v558
        %v687 = vunpack.c.l.b16 %v559
        %v688 = vunpack.c.l.b16 %v560
        %v689 = vunpack.c.l.b16 %v561
        %v690 = vunpack.c.l.b16 %v562
        %v691 = vunpack.c.l.b16 %v563
        %v692 = vunpack.c.l.b16 %v564
        %v693 = vunpack.c.l.b16 %v565
        %v694 = vunpack.c.l.b16 %v566
        %v695 = vunpack.c.l.b16 %v567
        %v696 = vunpack.c.l.b16 %v568
        %v697 = vunpack.c.l.b16 %v569
        %v698 = vunpack.c.l.b16 %v570
        %v699 = vunpack.c.l.b16 %v571
        %v700 = vunpack.c.l.b16 %v572
        %v701 = vunpack.c.l.b16 %v573
        %v702 = vunpack.c.l.b16 %v574
        %v703 = vunpack.c.l.b16 %v575
        %v704 = vunpack.c.l.b16 %v576
        %v705 = vunpack.c.l.b16 %v577
        %v706 = vunpack.c.l.b16 %v578
        %v707 = vunpack.c.l.b16 %v579
        %v708 = vunpack.c.l.b16 %v580
        %v709 = vunpack.c.l.b16 %v581
        %v710 = vunpack.c.l.b16 %v582
        %v711 = vunpack.c.l.b16 %v583
        %v712 = vunpack.c.l.b16 %v584
        %v713 = vunpack.c.l.b16 %v585
        %v714 = vunpack.c.l.b16 %v586
        %v715 = vunpack.c.l.b16 %v587
        %v716 = vunpack.c.l.b16 %v588
        %v717 = vunpack.c.l.b16 %v589
        %v718 = vunpack.c.l.b16 %v590
        %v719 = vunpack.c.l.b16 %v591
        %v720 = vunpack.c.l.b16 %v592
        %v721 = vunpack.c.l.b16 %v593
        %v722 = vunpack.c.l.b16 %v594
        %v723 = vunpack.c.l.b16 %v595
        %v724 = vunpack.c.l.b16 %v596
        %v725 = vunpack.c.l.b16 %v597
        %v726 = vunpack.c.l.b16 %v598
        %v727 = vunpack.c.l.b16 %v599
        %v728 = vunpack.c.l.b16 %v600
        %v729 = vunpack.c.l.b16 %v601
        %v730 = vunpack.c.l.b16 %v602
        %v731 = vunpack.c.l.b16 %v603
        %v732 = vunpack.c.l.b16 %v604
        %v733 = vunpack.c.l.b16 %v605
        %v734 = vunpack.c.l.b16 %v606
        %v735 = vunpack.c.l.b16 %v607
        %v736 = vunpack.c.l.b16 %v608
        %v737 = vunpack.c.l.b16 %v609
        %v738 = vunpack.c.l.b16 %v610
        %v739 = vunpack.c.l.b16 %v611
        %v740 = vpack.c.b16 %v677, %v676
        %v741 = vpack.c.b16 %v679, %v678
        %v742 = vpack.c.b16 %v681, %v680
        %v743 = vpack.c.b16 %v683, %v682
        %v744 = vpack.c.b16 %v685, %v684
        %v745 = vpack.c.b16 %v687, %v686
        %v746 = vpack.c.b16 %v689, %v688
        %v747 = vpack.c.b16 %v691, %v690
        %v748 = vpack.c.b16 %v693, %v692
        %v749 = vpack.c.b16 %v695, %v694
        %v750 = vpack.c.b16 %v697, %v696
        %v751 = vpack.c.b16 %v699, %v698
        %v752 = vpack.c.b16 %v701, %v700
        %v753 = vpack.c.b16 %v703, %v702
        %v754 = vpack.c.b16 %v705, %v704
        %v755 = vpack.c.b16 %v707, %v706
        %v756 = vpack.c.b16 %v709, %v708
        %v757 = vpack.c.b16 %v711, %v710
        %v758 = vpack.c.b16 %v713, %v712
        %v759 = vpack.c.b16 %v715, %v714
        %v760 = vpack.c.b16 %v717, %v716
        %v761 = vpack.c.b16 %v719, %v718
        %v762 = vpack.c.b16 %v721, %v720
        %v763 = vpack.c.b16 %v723, %v722
        %v764 = vpack.c.b16 %v725, %v724
        %v765 = vpack.c.b16 %v727, %v726
        %v766 = vpack.c.b16 %v729, %v728
        %v767 = vpack.c.b16 %v731, %v730
        %v768 = vpack.c.b16 %v733, %v732
        %v769 = vpack.c.b16 %v735, %v734
        %v770 = vpack.c.b16 %v737, %v736
        %v771 = vpack.c.b16 %v739, %v738
        %804 = vmatprep.subr.bf16.mxu0 0
        %805 = vmatpush1.bf16.msra.mxu0 %v740
        %806 = vmatprep.subr.bf16.mxu0 0
        %807 = vmatpush1.bf16.msra.mxu0 %v741
        %808 = vmatprep.subr.bf16.mxu0 0
        %809 = vmatpush1.bf16.msra.mxu0 %v742
        %810 = vmatprep.subr.bf16.mxu0 0
        %811 = vmatpush1.bf16.msra.mxu0 %v743
        %812 = vmatprep.subr.bf16.mxu0 0
        %813 = vmatpush1.bf16.msra.mxu0 %v744
        %814 = vmatprep.subr.bf16.mxu0 0
        %815 = vmatpush1.bf16.msra.mxu0 %v745
        %816 = vmatprep.subr.bf16.mxu0 0
        %817 = vmatpush1.bf16.msra.mxu0 %v746
        %818 = vmatprep.subr.bf16.mxu0 0
        %819 = vmatpush1.bf16.msra.mxu0 %v747
        %820 = vmatprep.subr.bf16.mxu0 0
        %821 = vmatpush1.bf16.msra.mxu0 %v748
        %822 = vmatprep.subr.bf16.mxu0 0
        %823 = vmatpush1.bf16.msra.mxu0 %v749
        %824 = vmatprep.subr.bf16.mxu0 0
        %825 = vmatpush1.bf16.msra.mxu0 %v750
        %826 = vmatprep.subr.bf16.mxu0 0
        %827 = vmatpush1.bf16.msra.mxu0 %v751
        %828 = vmatprep.subr.bf16.mxu0 0
        %829 = vmatpush1.bf16.msra.mxu0 %v752
        %830 = vmatprep.subr.bf16.mxu0 0
        %831 = vmatpush1.bf16.msra.mxu0 %v753
        %832 = vmatprep.subr.bf16.mxu0 0
        %833 = vmatpush1.bf16.msra.mxu0 %v754
        %834 = vmatprep.subr.bf16.mxu0 0
        %835 = vmatpush1.bf16.msra.mxu0 %v755
        %836 = vmatprep.mubr.bf16.mxu0 %v545
        %837 = vmatmul.mubr.bf16.gmra.mrb[0].mxu0 %v544
        %v838 = vpop.f32.mrb[0].mxu0
        %v839 = vadd.f32 0.0, %v838
        %v840 = vpop.f32.mrb[0].mxu0
        %v841 = vpop.f32.mrb[0].mxu0
        %v842 = vpop.f32.mrb[0].mxu0
        %843 = vdwg.mxu0
        %844 = vmatprep.subr.bf16.mxu0 0
        %845 = vmatpush1.bf16.msra.mxu0 %v756
        %846 = vmatprep.subr.bf16.mxu0 0
        %847 = vmatpush1.bf16.msra.mxu0 %v757
        %848 = vmatprep.subr.bf16.mxu0 0
        %849 = vmatpush1.bf16.msra.mxu0 %v758
        %850 = vmatprep.subr.bf16.mxu0 0
        %851 = vmatpush1.bf16.msra.mxu0 %v759
        %852 = vmatprep.subr.bf16.mxu0 0
        %853 = vmatpush1.bf16.msra.mxu0 %v760
        %854 = vmatprep.subr.bf16.mxu0 0
        %855 = vmatpush1.bf16.msra.mxu0 %v761
        %856 = vmatprep.subr.bf16.mxu0 0
        %857 = vmatpush1.bf16.msra.mxu0 %v762
        %858 = vmatprep.subr.bf16.mxu0 0
        %859 = vmatpush1.bf16.msra.mxu0 %v763
        %860 = vmatprep.subr.bf16.mxu0 0
        %861 = vmatpush1.bf16.msra.mxu0 %v764
        %862 = vmatprep.subr.bf16.mxu0 0
        %863 = vmatpush1.bf16.msra.mxu0 %v765
        %864 = vmatprep.subr.bf16.mxu0 0
        %865 = vmatpush1.bf16.msra.mxu0 %v766
        %866 = vmatprep.subr.bf16.mxu0 0
        %867 = vmatpush1.bf16.msra.mxu0 %v767
        %868 = vmatprep.subr.bf16.mxu0 0
        %869 = vmatpush1.bf16.msra.mxu0 %v768
        %870 = vmatprep.subr.bf16.mxu0 0
        %871 = vmatpush1.bf16.msra.mxu0 %v769
        %872 = vmatprep.subr.bf16.mxu0 0
        %873 = vmatpush1.bf16.msra.mxu0 %v770
        %874 = vmatprep.subr.bf16.mxu0 0
        %875 = vmatpush1.bf16.msra.mxu0 %v771
        %876 = vmatprep.mubr.bf16.mxu0 %v547
        %877 = vmatmul.mubr.bf16.gmra.mrb[0].mxu0 %v546
        %v878 = vpop.f32.mrb[0].mxu0
        %v879 = vadd.f32 %v839, %v878
        %v880 = vpop.f32.mrb[0].mxu0
        %v881 = vpop.f32.mrb[0].mxu0
        %v882 = vpop.f32.mrb[0].mxu0
        %883 = vdwg.mxu0
        %v884 = vadd.f32 %v520, %v879
        %vm885 = vcmask 517120
        %886 = vst.msk [vmem:[#allocation2] sm:$0x3] %vm885, %v884
        %p887 = scmp.eq.s32.totalorder %s31, 1
        // Predicated region
        $region81: #{tpu_custom_call.1} parent=71 // pred_check
          %p888 = pneg %p887
        $region82: #{tpu_custom_call.1} parent=71 // pred_check_branch
          %890 = sbr.rel (%p888) target = $region84
        $region83: #{tpu_custom_call.1} parent=71 // pred_region
          %v891 = vld [vmem:[#allocation2] sm:$0x3]
          %v892 = vld [vmem:[%s3] sm:$0x1]
          %v894 = vlaneseq
          %v895 = vshrl.u32 %v894, 7
          %v896 = vsub.s32 0, %v895
          %v897 = vrot.slane %v892, %v896
          %v899 = vadd.f32 %v891, %v897
          %v900 = vld [vmem:[%s512] sm:$0x3]
          %v901 = vpack.c.bf16 %v900, %v900
          %v902 = vld [vmem:[%s5] sm:$0xf]
          %v903 = vld [vmem:[%s6] sm:$0x1]
          %v905 = vlaneseq
          %v906 = vshrl.u32 %v905, 7
          %v907 = vsub.s32 0, %v906
          %v908 = vrot.slane %v903, %v907
          %vm910 = vcmask 64512
          %v912 = vsel %vm910, %v901, 0
          %vm914 = vcmask 1043456
          %v916 = vsel %vm914, %v902, 0
          %918 = vmatprep.subr.bf16.mxu0 0
          %919 = vmatpush1.bf16.msra.mxu0 %v916
          %920 = vmatprep.subr.bf16.mxu0 0
          %921 = vmatpush1.bf16.msra.mxu0 0
          %922 = vmatprep.subr.bf16.mxu0 0
          %923 = vmatpush1.bf16.msra.mxu0 0
          %924 = vmatprep.subr.bf16.mxu0 0
          %925 = vmatpush1.bf16.msra.mxu0 0
          %926 = vmatprep.subr.bf16.mxu0 0
          %927 = vmatpush1.bf16.msra.mxu0 0
          %928 = vmatprep.subr.bf16.mxu0 0
          %929 = vmatpush1.bf16.msra.mxu0 0
          %930 = vmatprep.subr.bf16.mxu0 0
          %931 = vmatpush1.bf16.msra.mxu0 0
          %932 = vmatprep.subr.bf16.mxu0 0
          %933 = vmatpush1.bf16.msra.mxu0 0
          %934 = vmatprep.subr.bf16.mxu0 0
          %935 = vmatpush1.bf16.msra.mxu0 0
          %936 = vmatprep.subr.bf16.mxu0 0
          %937 = vmatpush1.bf16.msra.mxu0 0
          %938 = vmatprep.subr.bf16.mxu0 0
          %939 = vmatpush1.bf16.msra.mxu0 0
          %940 = vmatprep.subr.bf16.mxu0 0
          %941 = vmatpush1.bf16.msra.mxu0 0
          %942 = vmatprep.subr.bf16.mxu0 0
          %943 = vmatpush1.bf16.msra.mxu0 0
          %944 = vmatprep.subr.bf16.mxu0 0
          %945 = vmatpush1.bf16.msra.mxu0 0
          %946 = vmatprep.subr.bf16.mxu0 0
          %947 = vmatpush1.bf16.msra.mxu0 0
          %948 = vmatprep.subr.bf16.mxu0 0
          %949 = vmatpush1.bf16.msra.mxu0 0
          %950 = vmatprep.mubr.bf16.mxu0 0
          %951 = vmatmul.mubr.bf16.gmra.mrb[0].mxu0 %v912
          %v952 = vpop.f32.mrb[0].mxu0
          %v953 = vadd.f32 %v908, %v952
          %v954 = vpop.f32.mrb[0].mxu0
          %v955 = vpop.f32.mrb[0].mxu0
          %v956 = vpop.f32.mrb[0].mxu0
          %957 = vdwg.mxu0
          %s958 = sld [smem:[#allocation3 + $0x2]]
          %s959 = sld [smem:[#allocation3 + $0x3]]
          %s960 = sld [smem:[#allocation3 + $0x4]]
          %s961 = sld [smem:[#allocation3 + $0x5]]
          %s962 = sld [smem:[#allocation3 + $0x6]]
          %s963 = sld [smem:[#allocation3 + $0x7]]
          %v964 = vstv %s958
          %v965 = vmul.f32 %v953, %v964
          %v966 = vstv %s959
          %v967 = vadd.f32 %v965, %v966
          %v968 = vstv %s960
          %v969 = vmul.f32 %v953, %v968
          %v970 = vstv %s961
          %v971 = vadd.f32 %v969, %v970
          %v972 = vsel %vm885, %v967, -inf
          %973 = vmax.xlane.f32.xlu0 %v972
          %v974 = vpop.xlane.xlu0 %973
          %v975 = vsub.f32 %v967, %v974
          %v976 = vmul.f32 %v975, 1.442695
          %v977 = vpow.pop %v976
          %v978 = vmul.f32 %v977, %v971
          %v979 = vsel %vm885, %v978, 0.0
          %980 = vadd.xlane.f32.xlu0 %v979
          %v981 = vpop.xlane.xlu0 %980
          %v982 = vsel %vm885, %v977, 0.0
          %983 = vadd.xlane.f32.xlu0 %v982
          %v984 = vpop.xlane.xlu0 %983
          %v985 = vrcp.pop %v984
          %v986 = vmul.f32 %v981, %v985
          %v987 = vstv %s962
          %v988 = vmul.f32 %v986, %v987
          %v989 = vstv %s963
          %v990 = vadd.f32 %v988, %v989
          %s991 = sld [smem:[#allocation3 + $0xa]]
          %s992 = sld [smem:[#allocation3 + $0xb]]
          %s993 = sld [smem:[#allocation3 + $0xc]]
          %s994 = sld [smem:[#allocation3 + $0xd]]
          %s995 = sld [smem:[#allocation3 + $0xe]]
          %s996 = sld [smem:[#allocation3 + $0xf]]
          %v997 = vstv %s991
          %v998 = vmul.f32 %v899, %v997
          %v999 = vstv %s992
          %v1000 = vadd.f32 %v998, %v999
          %v1001 = vstv %s993
          %v1002 = vmul.f32 %v899, %v1001
          %v1003 = vstv %s994
          %v1004 = vadd.f32 %v1002, %v1003
          %v1005 = vsel %vm885, %v1000, -inf
          %1006 = vmax.xlane.f32.xlu0 %v1005
          %v1007 = vpop.xlane.xlu0 %1006
          %v1008 = vsub.f32 %v1000, %v1007
          %v1009 = vmul.f32 %v1008, 1.442695
          %v1010 = vpow.pop %v1009
          %v1011 = vmul.f32 %v1010, %v1004
          %v1012 = vsel %vm885, %v1011, 0.0
          %1013 = vadd.xlane.f32.xlu0 %v1012
          %v1014 = vpop.xlane.xlu0 %1013
          %v1015 = vsel %vm885, %v1010, 0.0
          %1016 = vadd.xlane.f32.xlu0 %v1015
          %v1017 = vpop.xlane.xlu0 %1016
          %v1018 = vrcp.pop %v1017
          %v1019 = vmul.f32 %v1014, %v1018
          %v1020 = vstv %s995
          %v1021 = vmul.f32 %v1019, %v1020
          %v1022 = vstv %s996
          %v1023 = vadd.f32 %v1021, %v1022
          %v1024 = vadd.f32 %v990, %v1023
          %v1025 = vadd.f32 %v1024, %v899
          %v1026 = vadd.f32 %v1025, %v953
          %v1027 = vld [vmem:[%s7] sm:$0xff]
          %v1028 = vld [vmem:[%s7 + $0x8] sm:$0xff]
          %v1029 = vld [vmem:[%s7 + $0x10] sm:$0xff]
          %v1030 = vld [vmem:[%s7 + $0x18] sm:$0xff]
          %v1031 = vld [vmem:[%s7 + $0x20] sm:$0xff]
          %v1032 = vld [vmem:[%s7 + $0x28] sm:$0xff]
          %v1033 = vld [vmem:[%s7 + $0x30] sm:$0xff]
          %v1034 = vld [vmem:[%s7 + $0x38] sm:$0xff]
          %v1035 = vld [vmem:[%s8] sm:$0x1]
          %v1037 = vlaneseq
          %v1038 = vshrl.u32 %v1037, 7
          %v1039 = vsub.s32 0, %v1038
          %v1040 = vrot.slane %v1035, %v1039
          %vm1042 = vcmask 523264
          %v1044 = vsel %vm1042, %v1026, 0
          %1046 = vmatprep.subr.mxu0 0.0
          %1047 = vmatpush1.msra.mxu0 %v1027
          %1048 = vmatprep.subr.mxu0 0.0
          %1049 = vmatpush1.msra.mxu0 %v1028
          %1050 = vmatprep.subr.mxu0 0.0
          %1051 = vmatpush1.msra.mxu0 %v1029
          %1052 = vmatprep.subr.mxu0 0.0
          %1053 = vmatpush1.msra.mxu0 %v1030
          %1054 = vmatprep.subr.mxu0 0.0
          %1055 = vmatpush1.msra.mxu0 %v1031
          %1056 = vmatprep.subr.mxu0 0.0
          %1057 = vmatpush1.msra.mxu0 %v1032
          %1058 = vmatprep.subr.mxu0 0.0
          %1059 = vmatpush1.msra.mxu0 %v1033
          %1060 = vmatprep.subr.mxu0 0.0
          %1061 = vmatpush1.msra.mxu0 %v1034
          %1062 = vmatprep.subr.mxu0 0.0
          %1063 = vmatpush1.msra.mxu0 0.0
          %1064 = vmatprep.subr.mxu0 0.0
          %1065 = vmatpush1.msra.mxu0 0.0
          %1066 = vmatprep.subr.mxu0 0.0
          %1067 = vmatpush1.msra.mxu0 0.0
          %1068 = vmatprep.subr.mxu0 0.0
          %1069 = vmatpush1.msra.mxu0 0.0
          %1070 = vmatprep.subr.mxu0 0.0
          %1071 = vmatpush1.msra.mxu0 0.0
          %1072 = vmatprep.subr.mxu0 0.0
          %1073 = vmatpush1.msra.mxu0 0.0
          %1074 = vmatprep.subr.mxu0 0.0
          %1075 = vmatpush1.msra.mxu0 0.0
          %1076 = vmatprep.subr.mxu0 0.0
          %1077 = vmatpush1.msra.mxu0 0.0
          %1078 = vmatprep.subr.mxu0 0.0
          %1079 = vmatpush1.msra.mxu0 0.0
          %1080 = vmatprep.subr.mxu0 0.0
          %1081 = vmatpush1.msra.mxu0 0.0
          %1082 = vmatprep.subr.mxu0 0.0
          %1083 = vmatpush1.msra.mxu0 0.0
          %1084 = vmatprep.subr.mxu0 0.0
          %1085 = vmatpush1.msra.mxu0 0.0
          %1086 = vmatprep.subr.mxu0 0.0
          %1087 = vmatpush1.msra.mxu0 0.0
          %1088 = vmatprep.subr.mxu0 0.0
          %1089 = vmatpush1.msra.mxu0 0.0
          %1090 = vmatprep.subr.mxu0 0.0
          %1091 = vmatpush1.msra.mxu0 0.0
          %1092 = vmatprep.subr.mxu0 0.0
          %1093 = vmatpush1.msra.mxu0 0.0
          %1094 = vmatprep.subr.mxu0 0.0
          %1095 = vmatpush1.msra.mxu0 0.0
          %1096 = vmatprep.subr.mxu0 0.0
          %1097 = vmatpush1.msra.mxu0 0.0
          %1098 = vmatprep.subr.mxu0 0.0
          %1099 = vmatpush1.msra.mxu0 0.0
          %1100 = vmatprep.subr.mxu0 0.0
          %1101 = vmatpush1.msra.mxu0 0.0
          %1102 = vmatprep.subr.mxu0 0.0
          %1103 = vmatpush1.msra.mxu0 0.0
          %1104 = vmatprep.subr.mxu0 0.0
          %1105 = vmatpush1.msra.mxu0 0.0
          %1106 = vmatprep.subr.mxu0 0.0
          %1107 = vmatpush1.msra.mxu0 0.0
          %1108 = vmatprep.subr.mxu0 0.0
          %1109 = vmatpush1.msra.mxu0 0.0
          %1110 = vmatprep.mubr.f32.mxu0 0.0
          %1111 = vmatmul.mubr.f32.gmra.mrb[0].mxu0 %v1044
          %v1112 = vpop.f32.mrb[0].mxu0
          %v1113 = vadd.f32 %v1040, %v1112
          %v1114 = vpop.f32.mrb[0].mxu0
          %1115 = vdwg.mxu0
          %vm1116 = vcmask 238592
          %v1117 = vsel %vm1116, %v1113, 0.0
          %1118 = vadd.xlane.f32.xlu0 %v1117
          %v1119 = vpop.xlane.xlu0 %1118
          %v1120 = vrcp.pop 30.0
          %v1121 = vmul.f32 %v1119, %v1120
          %v1122 = vsub.f32 %v1113, %v1121
          %v1123 = vmul.f32 %v1122, %v1122
          %v1124 = vsel %vm1116, %v1123, 0.0
          %1125 = vadd.xlane.f32.xlu0 %v1124
          %v1126 = vpop.xlane.xlu0 %1125
          %v1127 = vmul.f32 %v1126, %v1120
          %v1128 = vadd.f32 %v1127, 1e-05
          %v1129 = vrsqrt.pop %v1128
          %v1130 = vmul.f32 %v1122, %v1129
          %v1131 = vld [vmem:[%s9] sm:$0x1]
          %v1133 = vlaneseq
          %v1134 = vshrl.u32 %v1133, 7
          %v1135 = vsub.s32 0, %v1134
          %v1136 = vrot.slane %v1131, %v1135
          %v1138 = vmul.f32 %v1130, %v1136
          %v1139 = vld [vmem:[%s10] sm:$0x1]
          %v1141 = vlaneseq
          %v1142 = vshrl.u32 %v1141, 7
          %v1143 = vsub.s32 0, %v1142
          %v1144 = vrot.slane %v1139, %v1143
          %v1146 = vadd.f32 %v1138, %v1144
          %v1147 = vmax.f32 %v1146, 0.0
          %v1148 = vld [vmem:[%s11] sm:$0xff]
          %v1149 = vld [vmem:[%s11 + $0x8] sm:$0xff]
          %v1150 = vld [vmem:[%s11 + $0x10] sm:$0xff]
          %v1151 = vld [vmem:[%s11 + $0x18] sm:$0x3f]
          %v1152 = vld [vmem:[%s12] sm:$0x1]
          %v1154 = vlaneseq
          %v1155 = vshrl.u32 %v1154, 7
          %v1156 = vsub.s32 0, %v1155
          %v1157 = vrot.slane %v1152, %v1156
          %vm1159 = vcmask 244736
          %v1161 = vsel %vm1159, %v1147, 0
          %vm1163 = vcmask 1045504
          %v1165 = vsel %vm1163, %v1151, 0
          %1167 = vmatprep.subr.mxu0 0.0
          %1168 = vmatpush1.msra.mxu0 %v1148
          %1169 = vmatprep.subr.mxu0 0.0
          %1170 = vmatpush1.msra.mxu0 %v1149
          %1171 = vmatprep.subr.mxu0 0.0
          %1172 = vmatpush1.msra.mxu0 %v1150
          %1173 = vmatprep.subr.mxu0 0.0
          %1174 = vmatpush1.msra.mxu0 %v1165
          %1175 = vmatprep.subr.mxu0 0.0
          %1176 = vmatpush1.msra.mxu0 0.0
          %1177 = vmatprep.subr.mxu0 0.0
          %1178 = vmatpush1.msra.mxu0 0.0
          %1179 = vmatprep.subr.mxu0 0.0
          %1180 = vmatpush1.msra.mxu0 0.0
          %1181 = vmatprep.subr.mxu0 0.0
          %1182 = vmatpush1.msra.mxu0 0.0
          %1183 = vmatprep.subr.mxu0 0.0
          %1184 = vmatpush1.msra.mxu0 0.0
          %1185 = vmatprep.subr.mxu0 0.0
          %1186 = vmatpush1.msra.mxu0 0.0
          %1187 = vmatprep.subr.mxu0 0.0
          %1188 = vmatpush1.msra.mxu0 0.0
          %1189 = vmatprep.subr.mxu0 0.0
          %1190 = vmatpush1.msra.mxu0 0.0
          %1191 = vmatprep.subr.mxu0 0.0
          %1192 = vmatpush1.msra.mxu0 0.0
          %1193 = vmatprep.subr.mxu0 0.0
          %1194 = vmatpush1.msra.mxu0 0.0
          %1195 = vmatprep.subr.mxu0 0.0
          %1196 = vmatpush1.msra.mxu0 0.0
          %1197 = vmatprep.subr.mxu0 0.0
          %1198 = vmatpush1.msra.mxu0 0.0
          %1199 = vmatprep.subr.mxu0 0.0
          %1200 = vmatpush1.msra.mxu0 0.0
          %1201 = vmatprep.subr.mxu0 0.0
          %1202 = vmatpush1.msra.mxu0 0.0
          %1203 = vmatprep.subr.mxu0 0.0
          %1204 = vmatpush1.msra.mxu0 0.0
          %1205 = vmatprep.subr.mxu0 0.0
          %1206 = vmatpush1.msra.mxu0 0.0
          %1207 = vmatprep.subr.mxu0 0.0
          %1208 = vmatpush1.msra.mxu0 0.0
          %1209 = vmatprep.subr.mxu0 0.0
          %1210 = vmatpush1.msra.mxu0 0.0
          %1211 = vmatprep.subr.mxu0 0.0
          %1212 = vmatpush1.msra.mxu0 0.0
          %1213 = vmatprep.subr.mxu0 0.0
          %1214 = vmatpush1.msra.mxu0 0.0
          %1215 = vmatprep.subr.mxu0 0.0
          %1216 = vmatpush1.msra.mxu0 0.0
          %1217 = vmatprep.subr.mxu0 0.0
          %1218 = vmatpush1.msra.mxu0 0.0
          %1219 = vmatprep.subr.mxu0 0.0
          %1220 = vmatpush1.msra.mxu0 0.0
          %1221 = vmatprep.subr.mxu0 0.0
          %1222 = vmatpush1.msra.mxu0 0.0
          %1223 = vmatprep.subr.mxu0 0.0
          %1224 = vmatpush1.msra.mxu0 0.0
          %1225 = vmatprep.subr.mxu0 0.0
          %1226 = vmatpush1.msra.mxu0 0.0
          %1227 = vmatprep.subr.mxu0 0.0
          %1228 = vmatpush1.msra.mxu0 0.0
          %1229 = vmatprep.subr.mxu0 0.0
          %1230 = vmatpush1.msra.mxu0 0.0
          %1231 = vmatprep.mubr.f32.mxu0 0.0
          %1232 = vmatmul.mubr.f32.gmra.mrb[0].mxu0 %v1161
          %v1233 = vpop.f32.mrb[0].mxu0
          %v1234 = vadd.f32 %v1157, %v1233
          %v1235 = vpop.f32.mrb[0].mxu0
          %1236 = vdwg.mxu0
          %vm1237 = vcmask 9216
          %1238 = vst.msk [vmem:[#allocation6] sm:$0x3] %vm1237, %v1234
        $region84: #{tpu_custom_call.1} parent=71 // pred_fallthru
          _
        // Predicated region
        $region85: #{tpu_custom_call.1} parent=71 // pred_check
          %p1239 = pneg %p346
        $region86: #{tpu_custom_call.1} parent=71 // pred_check_branch
          %1241 = sbr.rel (%p1239) target = $region88
        $region87: #{tpu_custom_call.1} parent=71 // pred_region
          %s1243 = ssub.s32 32, 32
          %1244 = vsyncadd [#allocation4], %s1243
          %s1245 = smul.addr %s30, 32
          %s1246 = scalar_lea.hbm %s13, %s1245
          %s1248 = sshll.u32 [#allocation6], 4
          %s1249 = int_to_ptr.vmem [resolvable:$true] %s1248
          %1251 = dma.vmem_to_hbm [thread:$0]  %s1249, 32, %s1246, [#allocation4]
        $region88: #{tpu_custom_call.1} parent=71 // pred_fallthru
          _
        // Predicated region
        $region89: #{tpu_custom_call.1} parent=71 // pred_check
          %p1252 = pneg %p346
        $region90: #{tpu_custom_call.1} parent=71 // pred_check_branch
          %1254 = sbr.rel (%p1252) target = $region92
        $region91: #{tpu_custom_call.1} parent=71 // pred_region
          %1255 = dma.done [#allocation4], 32
        $region92: #{tpu_custom_call.1} parent=71 // pred_fallthru
          _
      $region72: #{tpu_custom_call.1} parent=5 // pred_fallthru
        _
      %p1256 = scmp.le.s32.totalorder 2, %s21
      // Predicated region
      $region93: #{tpu_custom_call.1} parent=5 // pred_check
        %p1257 = pneg %p1256
      $region94: #{tpu_custom_call.1} parent=5 // pred_check_branch
        %1259 = sbr.rel (%p1257) target = $region96
      $region95: #{tpu_custom_call.1} parent=5 // pred_region
        %s1260 = ssub.s32 %s21, 2
      $region96: #{tpu_custom_call.1} parent=5 // pred_fallthru
        _
    $region6: #{tpu_custom_call.1} parent=1 // loop_footer
      %s25 = sadd.s32 1, %s21
    $region7: #{tpu_custom_call.1} parent=1 // loop_footer_branch
      %20 = sbr.rel target = $region3
    $region8: #{tpu_custom_call.1} parent=1 // loop_exit
      _
    %1261 = vsyncpa [#allocation4], 1
    %s1262 = scalar_lea.sflag [#allocation4], 1
    %1263 = vsyncpa %s1262, 1
    %1264 = vsyncpa [#allocation5], 1
    %s1265 = scalar_lea.sflag [#allocation5], 1
    %1266 = vsyncpa %s1265, 1

</llo_original>
